<compile_context>
chip_gen: v7x
topology: tpu7x:2x2x1
jax: 0.10.0
libtpu: 0.0.40
codegen_flags: <defaults>
</compile_context>

<pallas_src>
import functools

import jax
import jax.numpy as jnp
from jax.experimental import pallas as pl
from jax.experimental.pallas import tpu as pltpu

EPS = 1e-8
BN_EPS = 1e-5


# ------------------------------ in-kernel helpers --------------------------- #

def _shift_lanes(x, d):
    """(C, L) -> y with y[:, i] = x[:, i + d] (static d), zeros outside [0, L)."""
    if d == 0:
        return x
    c, l = x.shape
    z = jnp.zeros((c, abs(d)), x.dtype)
    if d > 0:
        return jnp.concatenate([x[:, d:], z], axis=1)
    return jnp.concatenate([z, x[:, : l + d]], axis=1)


def _conv3x3_cm(x, w, bias, H, W, left_ok, right_ok, relu):
    """Channel-major 3x3 / stride-1 / pad-1 conv.

    x: (Cin, H*W); w: (Cout, 9*Cin) with columns ordered (kh*3+kw)*Cin + cin;
    bias: (Cout, 1) or None.  Returns (Cout, H*W) float32, lane dense.
    """
    taps = []
    for kh in range(3):
        for kw in range(3):
            d = (kh - 1) * W + (kw - 1)
            t = _shift_lanes(x, d)
            if kw == 0:        # source column w-1 must exist
                t = jnp.where(left_ok, t, 0.0)
            elif kw == 2:      # source column w+1 must exist
                t = jnp.where(right_ok, t, 0.0)
            taps.append(t)
    patch = jnp.concatenate(taps, axis=0)                  # (9*Cin, H*W)
    y = jax.lax.dot_general(w, patch,
                            dimension_numbers=(((1,), (0,)), ((), ())),
                            preferred_element_type=jnp.float32)
    if bias is not None:
        y = y + bias
    if relu:
        y = jnp.maximum(y, 0.0)
    return y


# --------------------------------- fused kernel ----------------------------- #

def separation_kernel(*refs, H, W, tau, add_noise):
    if add_noise:
        (x_ref, noise_ref, w1_ref, b1_ref, w2_ref, b2_ref, w3_ref,
         r_ref, nr_ref, m_ref) = refs
    else:
        (x_ref, w1_ref, b1_ref, w2_ref, b2_ref, w3_ref,
         r_ref, nr_ref, m_ref) = refs
        noise_ref = None

    HW = H * W
    col = jax.lax.broadcasted_iota(jnp.int32, (1, HW), 1) % W
    left_ok = col >= 1
    right_ok = col <= (W - 2)

    feat = x_ref[0].astype(jnp.float32)                    # (C, H*W)

    # conv1 + folded BN1 + ReLU   (K = 9*C)
    h = _conv3x3_cm(feat, w1_ref[...], b1_ref[...], H, W, left_ok, right_ok, True)
    # conv2 + folded BN2 + ReLU   (K = 9*nc)
    h = _conv3x3_cm(h, w2_ref[...], b2_ref[...], H, W, left_ok, right_ok, True)
    # conv3 (no BN / no bias)     -> logits (C, H*W)
    logits = _conv3x3_cm(h, w3_ref[...], None, H, W, left_ok, right_ok, False)

    # sigmoid -> GumbelSigmoid (2-way softmax == sigmoid of logit difference)
    s = jax.nn.sigmoid(logits)
    z = jnp.log(s + EPS) - jnp.log(1.0 - s + EPS)
    if add_noise:
        # Gumbel(a) - Gumbel(b) ~ Logistic(0, 1): one noise add instead of two.
        z = z + noise_ref[0]
    mask = jax.nn.sigmoid(z / (tau + EPS))

    r = feat * mask
    m_ref[...] = mask[None].astype(m_ref.dtype)
    r_ref[...] = r[None].astype(r_ref.dtype)
    nr_ref[...] = (feat - r)[None].astype(nr_ref.dtype)


# --------------------------------- wrapper ----------------------------------- #

def separation_pallas(feat_nchw, params, *, tau, is_eval, noise_key=None):
    """Equivalent of Separation.forward; feat_nchw: (B, C, H, W) float32."""
    B, C, H, W = feat_nchw.shape
    HW = H * W
    add_noise = not is_eval

    feat_flat = feat_nchw.reshape(B, C, HW)                # lane-dense NCHW

    kernel = functools.partial(separation_kernel, H=H, W=W, tau=tau,
                               add_noise=add_noise)

    flat_shape = jax.ShapeDtypeStruct((B, C, HW), jnp.float32)
    flat_spec = pl.BlockSpec((1, C, HW), lambda b: (b, 0, 0))

    def w_spec(arr):
        return pl.BlockSpec(arr.shape, lambda b, _nd=arr.ndim: (0,) * _nd)

    inputs = [feat_flat]
    in_specs = [flat_spec]
    if add_noise:
        if noise_key is None:
            noise_key = jax.random.PRNGKey(0)
        # TODO(synk): training-mode BatchNorm batch statistics not implemented
        # (BN folded with fixed inference statistics).
        noise = jax.random.logistic(noise_key, (B, C, HW), jnp.float32)
        inputs.append(noise)
        in_specs.append(flat_spec)

    weights = [params["w1"], params["b1"], params["w2"], params["b2"],
               params["w3"]]
    inputs += weights
    in_specs += [w_spec(a) for a in weights]

    r, nr, m = pl.pallas_call(
        kernel,
        out_shape=(flat_shape, flat_shape, flat_shape),
        grid=(B,),
        in_specs=in_specs,
        out_specs=(flat_spec, flat_spec, flat_spec),
        compiler_params=pltpu.CompilerParams(
            dimension_semantics=("parallel",)),
    )(*inputs)

    unflat = lambda t: t.reshape(B, C, H, W)
    return unflat(r), unflat(nr), unflat(m)


# ------------------------------ parameters ----------------------------------- #

def init_params(key, C, num_channel):
    """Deterministic synthetic parameters, pre-folded for the fused kernel.

    Conv weights stored as (Cout, 9*Cin) with column index (kh*3+kw)*Cin + cin.
    """
    ks = jax.random.split(key, 12)
    nc = num_channel

    def conv_w(k, cout, cin):
        fan_in = 9 * cin
        return jax.random.normal(k, (cout, 3, 3, cin), jnp.float32) / jnp.sqrt(fan_in)

    def bn(k1, k2, k3, k4, c):
        gamma = 1.0 + 0.1 * jax.random.normal(k1, (c,), jnp.float32)
        beta = 0.1 * jax.random.normal(k2, (c,), jnp.float32)
        mean = 0.1 * jax.random.normal(k3, (c,), jnp.float32)
        var = 0.5 + jnp.abs(jax.random.normal(k4, (c,), jnp.float32))
        scale = gamma / jnp.sqrt(var + BN_EPS)
        bias = beta - mean * scale
        return scale, bias

    w1 = conv_w(ks[0], nc, C)
    s1, b1 = bn(ks[1], ks[2], ks[3], ks[4], nc)
    w2 = conv_w(ks[5], nc, nc)
    s2, b2 = bn(ks[6], ks[7], ks[8], ks[9], nc)
    w3 = conv_w(ks[10], C, nc)

    return {
        # BN scale folded into conv weights; bias shaped (Cout, 1) for lane bcast.
        "w1": (w1 * s1[:, None, None, None]).reshape(nc, 9 * C),
        "b1": b1[:, None],
        "w2": (w2 * s2[:, None, None, None]).reshape(nc, 9 * nc),
        "b2": b2[:, None],
        "w3": w3.reshape(C, 9 * nc),
    }


# ------------------------------ pure-JAX reference --------------------------- #

def separation_reference_eval(feat_nchw, params, *, tau):
    """Eval-mode XLA reference (zero noise) to validate the kernel."""
    B, C, H, W = feat_nchw.shape
    nc = params["b1"].shape[0]
    x = jnp.transpose(feat_nchw, (0, 2, 3, 1))             # NHWC

    def conv(x, w2d, cin):
        cout = w2d.shape[0]
        w = jnp.transpose(w2d.reshape(cout, 3, 3, cin), (1, 2, 3, 0))  # HWIO
        return jax.lax.conv_general_dilated(
            x, w, window_strides=(1, 1), padding="SAME",
            dimension_numbers=("NHWC", "HWIO", "NHWC"),
            precision=jax.lax.Precision.HIGHEST)

    h = jax.nn.relu(conv(x, params["w1"], C) + params["b1"][:, 0])
    h = jax.nn.relu(conv(h, params["w2"], nc) + params["b2"][:, 0])
    logits = conv(h, params["w3"], nc)
    s = jax.nn.sigmoid(logits)
    mask = jax.nn.sigmoid(
        (jnp.log(s + EPS) - jnp.log(1.0 - s + EPS)) / (tau + EPS))
    mask = jnp.transpose(mask, (0, 3, 1, 2))                # NCHW
    return feat_nchw * mask, feat_nchw * (1.0 - mask), mask


# ----------------------------------- main ------------------------------------ #

if __name__ == "__main__":
    B, C, H, W = 2, 4, 16, 16
    num_channel = 32
    tau = 0.1

    key = jax.random.PRNGKey(0)
    k_feat, k_param, k_noise = jax.random.split(key, 3)

    feat = jax.random.normal(k_feat, (B, C, H, W), jnp.float32)
    params = init_params(k_param, C, num_channel)

    # Training mode (logistic noise == difference of two Gumbel draws).
    r_feat, nr_feat, mask = separation_pallas(
        feat, params, tau=tau, is_eval=False, noise_key=k_noise)
    jax.block_until_ready((r_feat, nr_feat, mask))

    assert r_feat.shape == (B, C, H, W)
    assert nr_feat.shape == (B, C, H, W)
    assert mask.shape == (B, C, H, W)
    assert bool(jnp.all(mask >= 0.0)) and bool(jnp.all(mask <= 1.0))
    assert bool(jnp.allclose(r_feat + nr_feat, feat, atol=1e-5))

    # Eval mode (noise path statically disabled) + cross-check vs XLA reference.
    r_e, nr_e, m_e = separation_pallas(feat, params, tau=tau, is_eval=True)
    jax.block_until_ready((r_e, nr_e, m_e))

    assert bool(jnp.all(m_e >= 0.0)) and bool(jnp.all(m_e <= 1.0))
    assert bool(jnp.allclose(r_e + nr_e, feat, atol=1e-5))
    assert bool(jnp.allclose(r_e, feat * m_e, atol=1e-6))

    _, _, m_xla = separation_reference_eval(feat, params, tau=tau)
    max_diff = float(jnp.max(jnp.abs(m_e - m_xla)))
    # Loose tolerance: tau=0.1 amplifies MXU-precision differences of the conv.
    assert max_diff < 0.1, f"mask mismatch vs reference: {max_diff}"

    print("KERNEL_OK")
</pallas_src>

<mosaic_0001>
module attributes {stable_mosaic.version = 11 : i64} {
  func.func @separation_kernel(%arg0: i32, %arg1: memref<1x4x256xf32, #tpu.memory_space<vmem>>, %arg2: memref<1x4x256xf32, #tpu.memory_space<vmem>>, %arg3: memref<32x36xf32, #tpu.memory_space<vmem>>, %arg4: memref<32x1xf32, #tpu.memory_space<vmem>>, %arg5: memref<32x288xf32, #tpu.memory_space<vmem>>, %arg6: memref<32x1xf32, #tpu.memory_space<vmem>>, %arg7: memref<4x288xf32, #tpu.memory_space<vmem>>, %arg8: memref<1x4x256xf32, #tpu.memory_space<vmem>>, %arg9: memref<1x4x256xf32, #tpu.memory_space<vmem>>, %arg10: memref<1x4x256xf32, #tpu.memory_space<vmem>>) attributes {dimension_semantics = [#tpu.dimension_semantics<parallel>], iteration_bounds = array<i64: 2>, scalar_prefetch = 0 : i64, scratch_operands = 0 : i64, tpu.core_type = #tpu.core_type<tc>, window_params = [{transform_indices = @transform_0, window_bounds = array<i64: 1, 4, 256>}, {transform_indices = @transform_1, window_bounds = array<i64: 1, 4, 256>}, {pipeline_mode = #tpu.pipeline_mode<synchronous>, transform_indices = @transform_2, window_bounds = array<i64: 32, 36>}, {pipeline_mode = #tpu.pipeline_mode<synchronous>, transform_indices = @transform_3, window_bounds = array<i64: 32, 1>}, {pipeline_mode = #tpu.pipeline_mode<synchronous>, transform_indices = @transform_4, window_bounds = array<i64: 32, 288>}, {pipeline_mode = #tpu.pipeline_mode<synchronous>, transform_indices = @transform_5, window_bounds = array<i64: 32, 1>}, {pipeline_mode = #tpu.pipeline_mode<synchronous>, transform_indices = @transform_6, window_bounds = array<i64: 4, 288>}, {transform_indices = @transform_7, window_bounds = array<i64: 1, 4, 256>}, {transform_indices = @transform_8, window_bounds = array<i64: 1, 4, 256>}, {transform_indices = @transform_9, window_bounds = array<i64: 1, 4, 256>}]} {
    %0 = tpu.iota {dimensions = array<i32: 1>} : vector<1x256xi32>
    %c16_i32 = arith.constant 16 : i32
    %c0_i32 = arith.constant 0 : i32
    %1 = arith.cmpi eq, %c16_i32, %c0_i32 : i32
    %c1_i32 = arith.constant 1 : i32
    %2 = arith.select %1, %c1_i32, %c16_i32 : i32
    %3 = vector.broadcast %2 : i32 to vector<1x256xi32>
    %4 = arith.remsi %0, %3 : vector<1x256xi32>
    %c0_i32_0 = arith.constant 0 : i32
    %5 = vector.broadcast %c0_i32_0 : i32 to vector<1x256xi32>
    %6 = arith.cmpi ne, %4, %5 : vector<1x256xi32>
    %c0_i32_1 = arith.constant 0 : i32
    %7 = vector.broadcast %c0_i32_1 : i32 to vector<1x256xi32>
    %8 = arith.cmpi slt, %4, %7 : vector<1x256xi32>
    %c0_i32_2 = arith.constant 0 : i32
    %9 = arith.cmpi slt, %2, %c0_i32_2 : i32
    %10 = vector.broadcast %9 : i1 to vector<1x256xi1>
    %11 = vector.broadcast %10 : vector<1x256xi1> to vector<1x256xi1>
    %12 = arith.xori %8, %11 : vector<1x256xi1>
    %13 = arith.andi %12, %6 : vector<1x256xi1>
    %14 = vector.broadcast %2 : i32 to vector<1x256xi32>
    %15 = arith.addi %4, %14 : vector<1x256xi32>
    %16 = arith.select %13, %15, %4 : vector<1x256xi1>, vector<1x256xi32>
    %c1_i32_3 = arith.constant 1 : i32
    %17 = vector.broadcast %c1_i32_3 : i32 to vector<1x256xi32>
    %18 = arith.cmpi sge, %16, %17 : vector<1x256xi32>
    %c14_i32 = arith.constant 14 : i32
    %19 = vector.broadcast %c14_i32 : i32 to vector<1x256xi32>
    %20 = arith.cmpi sle, %16, %19 : vector<1x256xi32>
    %c0 = arith.constant 0 : index
    %c0_4 = arith.constant 0 : index
    %c0_5 = arith.constant 0 : index
    %21 = vector.load %arg1[%c0, %c0_4, %c0_5] : memref<1x4x256xf32, #tpu.memory_space<vmem>>, vector<1x4x256xf32>
    %22 = vector.shape_cast %21 : vector<1x4x256xf32> to vector<4x256xf32>
    %c0_6 = arith.constant 0 : index
    %c0_7 = arith.constant 0 : index
    %23 = vector.load %arg3[%c0_6, %c0_7] : memref<32x36xf32, #tpu.memory_space<vmem>>, vector<32x36xf32>
    %c0_8 = arith.constant 0 : index
    %c0_9 = arith.constant 0 : index
    %24 = vector.load %arg4[%c0_8, %c0_9] : memref<32x1xf32, #tpu.memory_space<vmem>>, vector<32x1xf32>
    %cst = arith.constant 0.000000e+00 : f32
    %25 = vector.broadcast %cst : f32 to vector<4x17xf32>
    %26 = vector.extract_strided_slice %22 {offsets = [0, 0], sizes = [4, 239], strides = [1, 1]} : vector<4x256xf32> to vector<4x239xf32>
    %27 = tpu.concatenate %25, %26 in 1 : vector<4x17xf32>, vector<4x239xf32> -> vector<4x256xf32>
    %cst_10 = arith.constant 0.000000e+00 : f32
    %28 = vector.shape_cast %18 : vector<1x256xi1> to vector<1x256xi1>
    %29 = vector.broadcast %28 : vector<1x256xi1> to vector<4x256xi1>
    %30 = vector.broadcast %cst_10 : f32 to vector<4x256xf32>
    %31 = arith.select %29, %27, %30 : vector<4x256xi1>, vector<4x256xf32>
    %cst_11 = arith.constant 0.000000e+00 : f32
    %32 = vector.broadcast %cst_11 : f32 to vector<4x16xf32>
    %33 = vector.extract_strided_slice %22 {offsets = [0, 0], sizes = [4, 240], strides = [1, 1]} : vector<4x256xf32> to vector<4x240xf32>
    %34 = tpu.concatenate %32, %33 in 1 : vector<4x16xf32>, vector<4x240xf32> -> vector<4x256xf32>
    %cst_12 = arith.constant 0.000000e+00 : f32
    %35 = vector.broadcast %cst_12 : f32 to vector<4x15xf32>
    %36 = vector.extract_strided_slice %22 {offsets = [0, 0], sizes = [4, 241], strides = [1, 1]} : vector<4x256xf32> to vector<4x241xf32>
    %37 = tpu.concatenate %35, %36 in 1 : vector<4x15xf32>, vector<4x241xf32> -> vector<4x256xf32>
    %cst_13 = arith.constant 0.000000e+00 : f32
    %38 = vector.shape_cast %20 : vector<1x256xi1> to vector<1x256xi1>
    %39 = vector.broadcast %38 : vector<1x256xi1> to vector<4x256xi1>
    %40 = vector.broadcast %cst_13 : f32 to vector<4x256xf32>
    %41 = arith.select %39, %37, %40 : vector<4x256xi1>, vector<4x256xf32>
    %cst_14 = arith.constant 0.000000e+00 : f32
    %42 = vector.broadcast %cst_14 : f32 to vector<4x1xf32>
    %43 = vector.extract_strided_slice %22 {offsets = [0, 0], sizes = [4, 255], strides = [1, 1]} : vector<4x256xf32> to vector<4x255xf32>
    %44 = tpu.concatenate %42, %43 in 1 : vector<4x1xf32>, vector<4x255xf32> -> vector<4x256xf32>
    %cst_15 = arith.constant 0.000000e+00 : f32
    %45 = vector.shape_cast %18 : vector<1x256xi1> to vector<1x256xi1>
    %46 = vector.broadcast %45 : vector<1x256xi1> to vector<4x256xi1>
    %47 = vector.broadcast %cst_15 : f32 to vector<4x256xf32>
    %48 = arith.select %46, %44, %47 : vector<4x256xi1>, vector<4x256xf32>
    %cst_16 = arith.constant 0.000000e+00 : f32
    %49 = vector.broadcast %cst_16 : f32 to vector<4x1xf32>
    %50 = vector.extract_strided_slice %22 {offsets = [0, 1], sizes = [4, 255], strides = [1, 1]} : vector<4x256xf32> to vector<4x255xf32>
    %51 = tpu.concatenate %50, %49 in 1 : vector<4x255xf32>, vector<4x1xf32> -> vector<4x256xf32>
    %cst_17 = arith.constant 0.000000e+00 : f32
    %52 = vector.shape_cast %20 : vector<1x256xi1> to vector<1x256xi1>
    %53 = vector.broadcast %52 : vector<1x256xi1> to vector<4x256xi1>
    %54 = vector.broadcast %cst_17 : f32 to vector<4x256xf32>
    %55 = arith.select %53, %51, %54 : vector<4x256xi1>, vector<4x256xf32>
    %cst_18 = arith.constant 0.000000e+00 : f32
    %56 = vector.broadcast %cst_18 : f32 to vector<4x15xf32>
    %57 = vector.extract_strided_slice %22 {offsets = [0, 15], sizes = [4, 241], strides = [1, 1]} : vector<4x256xf32> to vector<4x241xf32>
    %58 = tpu.concatenate %57, %56 in 1 : vector<4x241xf32>, vector<4x15xf32> -> vector<4x256xf32>
    %cst_19 = arith.constant 0.000000e+00 : f32
    %59 = vector.shape_cast %18 : vector<1x256xi1> to vector<1x256xi1>
    %60 = vector.broadcast %59 : vector<1x256xi1> to vector<4x256xi1>
    %61 = vector.broadcast %cst_19 : f32 to vector<4x256xf32>
    %62 = arith.select %60, %58, %61 : vector<4x256xi1>, vector<4x256xf32>
    %cst_20 = arith.constant 0.000000e+00 : f32
    %63 = vector.broadcast %cst_20 : f32 to vector<4x16xf32>
    %64 = vector.extract_strided_slice %22 {offsets = [0, 16], sizes = [4, 240], strides = [1, 1]} : vector<4x256xf32> to vector<4x240xf32>
    %65 = tpu.concatenate %64, %63 in 1 : vector<4x240xf32>, vector<4x16xf32> -> vector<4x256xf32>
    %cst_21 = arith.constant 0.000000e+00 : f32
    %66 = vector.broadcast %cst_21 : f32 to vector<4x17xf32>
    %67 = vector.extract_strided_slice %22 {offsets = [0, 17], sizes = [4, 239], strides = [1, 1]} : vector<4x256xf32> to vector<4x239xf32>
    %68 = tpu.concatenate %67, %66 in 1 : vector<4x239xf32>, vector<4x17xf32> -> vector<4x256xf32>
    %cst_22 = arith.constant 0.000000e+00 : f32
    %69 = vector.shape_cast %20 : vector<1x256xi1> to vector<1x256xi1>
    %70 = vector.broadcast %69 : vector<1x256xi1> to vector<4x256xi1>
    %71 = vector.broadcast %cst_22 : f32 to vector<4x256xf32>
    %72 = arith.select %70, %68, %71 : vector<4x256xi1>, vector<4x256xf32>
    %73 = tpu.concatenate %31, %34, %41, %48, %22, %55, %62, %65, %72 in 0 : vector<4x256xf32>, vector<4x256xf32>, vector<4x256xf32>, vector<4x256xf32>, vector<4x256xf32>, vector<4x256xf32>, vector<4x256xf32>, vector<4x256xf32>, vector<4x256xf32> -> vector<36x256xf32>
    %cst_23 = arith.constant dense<0.000000e+00> : vector<32x256xf32>
    %74 = tpu.matmul %23, %73, %cst_23 {dimension_numbers = #tpu.dot_dimension_numbers<[1], [0], [0], [1], [0, 0, 1, 1], [], []>} : vector<32x36xf32>, vector<36x256xf32>, vector<32x256xf32> -> vector<32x256xf32>
    %75 = vector.broadcast %24 : vector<32x1xf32> to vector<32x256xf32>
    %76 = arith.addf %74, %75 : vector<32x256xf32>
    %cst_24 = arith.constant 0.000000e+00 : f32
    %77 = vector.broadcast %cst_24 : f32 to vector<32x256xf32>
    %78 = arith.maximumf %76, %77 : vector<32x256xf32>
    %c0_25 = arith.constant 0 : index
    %c0_26 = arith.constant 0 : index
    %79 = vector.load %arg5[%c0_25, %c0_26] : memref<32x288xf32, #tpu.memory_space<vmem>>, vector<32x288xf32>
    %c0_27 = arith.constant 0 : index
    %c0_28 = arith.constant 0 : index
    %80 = vector.load %arg6[%c0_27, %c0_28] : memref<32x1xf32, #tpu.memory_space<vmem>>, vector<32x1xf32>
    %cst_29 = arith.constant 0.000000e+00 : f32
    %81 = vector.broadcast %cst_29 : f32 to vector<32x17xf32>
    %82 = vector.extract_strided_slice %78 {offsets = [0, 0], sizes = [32, 239], strides = [1, 1]} : vector<32x256xf32> to vector<32x239xf32>
    %83 = tpu.concatenate %81, %82 in 1 : vector<32x17xf32>, vector<32x239xf32> -> vector<32x256xf32>
    %cst_30 = arith.constant 0.000000e+00 : f32
    %84 = vector.shape_cast %18 : vector<1x256xi1> to vector<1x256xi1>
    %85 = vector.broadcast %84 : vector<1x256xi1> to vector<32x256xi1>
    %86 = vector.broadcast %cst_30 : f32 to vector<32x256xf32>
    %87 = arith.select %85, %83, %86 : vector<32x256xi1>, vector<32x256xf32>
    %cst_31 = arith.constant 0.000000e+00 : f32
    %88 = vector.broadcast %cst_31 : f32 to vector<32x16xf32>
    %89 = vector.extract_strided_slice %78 {offsets = [0, 0], sizes = [32, 240], strides = [1, 1]} : vector<32x256xf32> to vector<32x240xf32>
    %90 = tpu.concatenate %88, %89 in 1 : vector<32x16xf32>, vector<32x240xf32> -> vector<32x256xf32>
    %cst_32 = arith.constant 0.000000e+00 : f32
    %91 = vector.broadcast %cst_32 : f32 to vector<32x15xf32>
    %92 = vector.extract_strided_slice %78 {offsets = [0, 0], sizes = [32, 241], strides = [1, 1]} : vector<32x256xf32> to vector<32x241xf32>
    %93 = tpu.concatenate %91, %92 in 1 : vector<32x15xf32>, vector<32x241xf32> -> vector<32x256xf32>
    %cst_33 = arith.constant 0.000000e+00 : f32
    %94 = vector.shape_cast %20 : vector<1x256xi1> to vector<1x256xi1>
    %95 = vector.broadcast %94 : vector<1x256xi1> to vector<32x256xi1>
    %96 = vector.broadcast %cst_33 : f32 to vector<32x256xf32>
    %97 = arith.select %95, %93, %96 : vector<32x256xi1>, vector<32x256xf32>
    %cst_34 = arith.constant 0.000000e+00 : f32
    %98 = vector.broadcast %cst_34 : f32 to vector<32x1xf32>
    %99 = vector.extract_strided_slice %78 {offsets = [0, 0], sizes = [32, 255], strides = [1, 1]} : vector<32x256xf32> to vector<32x255xf32>
    %100 = tpu.concatenate %98, %99 in 1 : vector<32x1xf32>, vector<32x255xf32> -> vector<32x256xf32>
    %cst_35 = arith.constant 0.000000e+00 : f32
    %101 = vector.shape_cast %18 : vector<1x256xi1> to vector<1x256xi1>
    %102 = vector.broadcast %101 : vector<1x256xi1> to vector<32x256xi1>
    %103 = vector.broadcast %cst_35 : f32 to vector<32x256xf32>
    %104 = arith.select %102, %100, %103 : vector<32x256xi1>, vector<32x256xf32>
    %cst_36 = arith.constant 0.000000e+00 : f32
    %105 = vector.broadcast %cst_36 : f32 to vector<32x1xf32>
    %106 = vector.extract_strided_slice %78 {offsets = [0, 1], sizes = [32, 255], strides = [1, 1]} : vector<32x256xf32> to vector<32x255xf32>
    %107 = tpu.concatenate %106, %105 in 1 : vector<32x255xf32>, vector<32x1xf32> -> vector<32x256xf32>
    %cst_37 = arith.constant 0.000000e+00 : f32
    %108 = vector.shape_cast %20 : vector<1x256xi1> to vector<1x256xi1>
    %109 = vector.broadcast %108 : vector<1x256xi1> to vector<32x256xi1>
    %110 = vector.broadcast %cst_37 : f32 to vector<32x256xf32>
    %111 = arith.select %109, %107, %110 : vector<32x256xi1>, vector<32x256xf32>
    %cst_38 = arith.constant 0.000000e+00 : f32
    %112 = vector.broadcast %cst_38 : f32 to vector<32x15xf32>
    %113 = vector.extract_strided_slice %78 {offsets = [0, 15], sizes = [32, 241], strides = [1, 1]} : vector<32x256xf32> to vector<32x241xf32>
    %114 = tpu.concatenate %113, %112 in 1 : vector<32x241xf32>, vector<32x15xf32> -> vector<32x256xf32>
    %cst_39 = arith.constant 0.000000e+00 : f32
    %115 = vector.shape_cast %18 : vector<1x256xi1> to vector<1x256xi1>
    %116 = vector.broadcast %115 : vector<1x256xi1> to vector<32x256xi1>
    %117 = vector.broadcast %cst_39 : f32 to vector<32x256xf32>
    %118 = arith.select %116, %114, %117 : vector<32x256xi1>, vector<32x256xf32>
    %cst_40 = arith.constant 0.000000e+00 : f32
    %119 = vector.broadcast %cst_40 : f32 to vector<32x16xf32>
    %120 = vector.extract_strided_slice %78 {offsets = [0, 16], sizes = [32, 240], strides = [1, 1]} : vector<32x256xf32> to vector<32x240xf32>
    %121 = tpu.concatenate %120, %119 in 1 : vector<32x240xf32>, vector<32x16xf32> -> vector<32x256xf32>
    %cst_41 = arith.constant 0.000000e+00 : f32
    %122 = vector.broadcast %cst_41 : f32 to vector<32x17xf32>
    %123 = vector.extract_strided_slice %78 {offsets = [0, 17], sizes = [32, 239], strides = [1, 1]} : vector<32x256xf32> to vector<32x239xf32>
    %124 = tpu.concatenate %123, %122 in 1 : vector<32x239xf32>, vector<32x17xf32> -> vector<32x256xf32>
    %cst_42 = arith.constant 0.000000e+00 : f32
    %125 = vector.shape_cast %20 : vector<1x256xi1> to vector<1x256xi1>
    %126 = vector.broadcast %125 : vector<1x256xi1> to vector<32x256xi1>
    %127 = vector.broadcast %cst_42 : f32 to vector<32x256xf32>
    %128 = arith.select %126, %124, %127 : vector<32x256xi1>, vector<32x256xf32>
    %129 = tpu.concatenate %87, %90, %97, %104, %78, %111, %118, %121, %128 in 0 : vector<32x256xf32>, vector<32x256xf32>, vector<32x256xf32>, vector<32x256xf32>, vector<32x256xf32>, vector<32x256xf32>, vector<32x256xf32>, vector<32x256xf32>, vector<32x256xf32> -> vector<288x256xf32>
    %cst_43 = arith.constant dense<0.000000e+00> : vector<32x256xf32>
    %130 = tpu.matmul %79, %129, %cst_43 {dimension_numbers = #tpu.dot_dimension_numbers<[1], [0], [0], [1], [0, 0, 1, 1], [], []>} : vector<32x288xf32>, vector<288x256xf32>, vector<32x256xf32> -> vector<32x256xf32>
    %131 = vector.broadcast %80 : vector<32x1xf32> to vector<32x256xf32>
    %132 = arith.addf %130, %131 : vector<32x256xf32>
    %cst_44 = arith.constant 0.000000e+00 : f32
    %133 = vector.broadcast %cst_44 : f32 to vector<32x256xf32>
    %134 = arith.maximumf %132, %133 : vector<32x256xf32>
    %c0_45 = arith.constant 0 : index
    %c0_46 = arith.constant 0 : index
    %135 = vector.load %arg7[%c0_45, %c0_46] : memref<4x288xf32, #tpu.memory_space<vmem>>, vector<4x288xf32>
    %cst_47 = arith.constant 0.000000e+00 : f32
    %136 = vector.broadcast %cst_47 : f32 to vector<32x17xf32>
    %137 = vector.extract_strided_slice %134 {offsets = [0, 0], sizes = [32, 239], strides = [1, 1]} : vector<32x256xf32> to vector<32x239xf32>
    %138 = tpu.concatenate %136, %137 in 1 : vector<32x17xf32>, vector<32x239xf32> -> vector<32x256xf32>
    %cst_48 = arith.constant 0.000000e+00 : f32
    %139 = vector.shape_cast %18 : vector<1x256xi1> to vector<1x256xi1>
    %140 = vector.broadcast %139 : vector<1x256xi1> to vector<32x256xi1>
    %141 = vector.broadcast %cst_48 : f32 to vector<32x256xf32>
    %142 = arith.select %140, %138, %141 : vector<32x256xi1>, vector<32x256xf32>
    %cst_49 = arith.constant 0.000000e+00 : f32
    %143 = vector.broadcast %cst_49 : f32 to vector<32x16xf32>
    %144 = vector.extract_strided_slice %134 {offsets = [0, 0], sizes = [32, 240], strides = [1, 1]} : vector<32x256xf32> to vector<32x240xf32>
    %145 = tpu.concatenate %143, %144 in 1 : vector<32x16xf32>, vector<32x240xf32> -> vector<32x256xf32>
    %cst_50 = arith.constant 0.000000e+00 : f32
    %146 = vector.broadcast %cst_50 : f32 to vector<32x15xf32>
    %147 = vector.extract_strided_slice %134 {offsets = [0, 0], sizes = [32, 241], strides = [1, 1]} : vector<32x256xf32> to vector<32x241xf32>
    %148 = tpu.concatenate %146, %147 in 1 : vector<32x15xf32>, vector<32x241xf32> -> vector<32x256xf32>
    %cst_51 = arith.constant 0.000000e+00 : f32
    %149 = vector.shape_cast %20 : vector<1x256xi1> to vector<1x256xi1>
    %150 = vector.broadcast %149 : vector<1x256xi1> to vector<32x256xi1>
    %151 = vector.broadcast %cst_51 : f32 to vector<32x256xf32>
    %152 = arith.select %150, %148, %151 : vector<32x256xi1>, vector<32x256xf32>
    %cst_52 = arith.constant 0.000000e+00 : f32
    %153 = vector.broadcast %cst_52 : f32 to vector<32x1xf32>
    %154 = vector.extract_strided_slice %134 {offsets = [0, 0], sizes = [32, 255], strides = [1, 1]} : vector<32x256xf32> to vector<32x255xf32>
    %155 = tpu.concatenate %153, %154 in 1 : vector<32x1xf32>, vector<32x255xf32> -> vector<32x256xf32>
    %cst_53 = arith.constant 0.000000e+00 : f32
    %156 = vector.shape_cast %18 : vector<1x256xi1> to vector<1x256xi1>
    %157 = vector.broadcast %156 : vector<1x256xi1> to vector<32x256xi1>
    %158 = vector.broadcast %cst_53 : f32 to vector<32x256xf32>
    %159 = arith.select %157, %155, %158 : vector<32x256xi1>, vector<32x256xf32>
    %cst_54 = arith.constant 0.000000e+00 : f32
    %160 = vector.broadcast %cst_54 : f32 to vector<32x1xf32>
    %161 = vector.extract_strided_slice %134 {offsets = [0, 1], sizes = [32, 255], strides = [1, 1]} : vector<32x256xf32> to vector<32x255xf32>
    %162 = tpu.concatenate %161, %160 in 1 : vector<32x255xf32>, vector<32x1xf32> -> vector<32x256xf32>
    %cst_55 = arith.constant 0.000000e+00 : f32
    %163 = vector.shape_cast %20 : vector<1x256xi1> to vector<1x256xi1>
    %164 = vector.broadcast %163 : vector<1x256xi1> to vector<32x256xi1>
    %165 = vector.broadcast %cst_55 : f32 to vector<32x256xf32>
    %166 = arith.select %164, %162, %165 : vector<32x256xi1>, vector<32x256xf32>
    %cst_56 = arith.constant 0.000000e+00 : f32
    %167 = vector.broadcast %cst_56 : f32 to vector<32x15xf32>
    %168 = vector.extract_strided_slice %134 {offsets = [0, 15], sizes = [32, 241], strides = [1, 1]} : vector<32x256xf32> to vector<32x241xf32>
    %169 = tpu.concatenate %168, %167 in 1 : vector<32x241xf32>, vector<32x15xf32> -> vector<32x256xf32>
    %cst_57 = arith.constant 0.000000e+00 : f32
    %170 = vector.shape_cast %18 : vector<1x256xi1> to vector<1x256xi1>
    %171 = vector.broadcast %170 : vector<1x256xi1> to vector<32x256xi1>
    %172 = vector.broadcast %cst_57 : f32 to vector<32x256xf32>
    %173 = arith.select %171, %169, %172 : vector<32x256xi1>, vector<32x256xf32>
    %cst_58 = arith.constant 0.000000e+00 : f32
    %174 = vector.broadcast %cst_58 : f32 to vector<32x16xf32>
    %175 = vector.extract_strided_slice %134 {offsets = [0, 16], sizes = [32, 240], strides = [1, 1]} : vector<32x256xf32> to vector<32x240xf32>
    %176 = tpu.concatenate %175, %174 in 1 : vector<32x240xf32>, vector<32x16xf32> -> vector<32x256xf32>
    %cst_59 = arith.constant 0.000000e+00 : f32
    %177 = vector.broadcast %cst_59 : f32 to vector<32x17xf32>
    %178 = vector.extract_strided_slice %134 {offsets = [0, 17], sizes = [32, 239], strides = [1, 1]} : vector<32x256xf32> to vector<32x239xf32>
    %179 = tpu.concatenate %178, %177 in 1 : vector<32x239xf32>, vector<32x17xf32> -> vector<32x256xf32>
    %cst_60 = arith.constant 0.000000e+00 : f32
    %180 = vector.shape_cast %20 : vector<1x256xi1> to vector<1x256xi1>
    %181 = vector.broadcast %180 : vector<1x256xi1> to vector<32x256xi1>
    %182 = vector.broadcast %cst_60 : f32 to vector<32x256xf32>
    %183 = arith.select %181, %179, %182 : vector<32x256xi1>, vector<32x256xf32>
    %184 = tpu.concatenate %142, %145, %152, %159, %134, %166, %173, %176, %183 in 0 : vector<32x256xf32>, vector<32x256xf32>, vector<32x256xf32>, vector<32x256xf32>, vector<32x256xf32>, vector<32x256xf32>, vector<32x256xf32>, vector<32x256xf32>, vector<32x256xf32> -> vector<288x256xf32>
    %cst_61 = arith.constant dense<0.000000e+00> : vector<4x256xf32>
    %185 = tpu.matmul %135, %184, %cst_61 {dimension_numbers = #tpu.dot_dimension_numbers<[1], [0], [0], [1], [0, 0, 1, 1], [], []>} : vector<4x288xf32>, vector<288x256xf32>, vector<4x256xf32> -> vector<4x256xf32>
    %186 = arith.negf %185 : vector<4x256xf32>
    %187 = math.exp %186 : vector<4x256xf32>
    %cst_62 = arith.constant 1.000000e+00 : f32
    %188 = vector.broadcast %cst_62 : f32 to vector<4x256xf32>
    %189 = arith.addf %188, %187 : vector<4x256xf32>
    %190 = arith.divf %188, %189 : vector<4x256xf32>
    %cst_63 = arith.constant 9.99999993E-9 : f32
    %191 = vector.broadcast %cst_63 : f32 to vector<4x256xf32>
    %192 = arith.addf %190, %191 : vector<4x256xf32>
    %193 = math.log %192 : vector<4x256xf32>
    %cst_64 = arith.constant 1.000000e+00 : f32
    %194 = vector.broadcast %cst_64 : f32 to vector<4x256xf32>
    %195 = arith.subf %194, %190 : vector<4x256xf32>
    %cst_65 = arith.constant 9.99999993E-9 : f32
    %196 = vector.broadcast %cst_65 : f32 to vector<4x256xf32>
    %197 = arith.addf %195, %196 : vector<4x256xf32>
    %198 = math.log %197 : vector<4x256xf32>
    %199 = arith.subf %193, %198 : vector<4x256xf32>
    %c0_66 = arith.constant 0 : index
    %c0_67 = arith.constant 0 : index
    %c0_68 = arith.constant 0 : index
    %200 = vector.load %arg2[%c0_66, %c0_67, %c0_68] : memref<1x4x256xf32, #tpu.memory_space<vmem>>, vector<1x4x256xf32>
    %201 = vector.shape_cast %200 : vector<1x4x256xf32> to vector<4x256xf32>
    %202 = arith.addf %199, %201 : vector<4x256xf32>
    %cst_69 = arith.constant 0.100000009 : f32
    %203 = vector.broadcast %cst_69 : f32 to vector<4x256xf32>
    %204 = arith.divf %202, %203 : vector<4x256xf32>
    %205 = arith.negf %204 : vector<4x256xf32>
    %206 = math.exp %205 : vector<4x256xf32>
    %cst_70 = arith.constant 1.000000e+00 : f32
    %207 = vector.broadcast %cst_70 : f32 to vector<4x256xf32>
    %208 = arith.addf %207, %206 : vector<4x256xf32>
    %209 = arith.divf %207, %208 : vector<4x256xf32>
    %210 = arith.mulf %22, %209 : vector<4x256xf32>
    %211 = vector.shape_cast %209 : vector<4x256xf32> to vector<1x4x256xf32>
    %c0_71 = arith.constant 0 : index
    %c0_72 = arith.constant 0 : index
    %c0_73 = arith.constant 0 : index
    %212 = vector.load %arg10[%c0_71, %c0_72, %c0_73] : memref<1x4x256xf32, #tpu.memory_space<vmem>>, vector<1x4x256xf32>
    tpu.vector_store %arg10[%c0_71, %c0_72, %c0_73], %211 {strides = array<i32>} : memref<1x4x256xf32, #tpu.memory_space<vmem>>, vector<1x4x256xf32>,
    %213 = vector.shape_cast %210 : vector<4x256xf32> to vector<1x4x256xf32>
    %c0_74 = arith.constant 0 : index
    %c0_75 = arith.constant 0 : index
    %c0_76 = arith.constant 0 : index
    %214 = vector.load %arg8[%c0_74, %c0_75, %c0_76] : memref<1x4x256xf32, #tpu.memory_space<vmem>>, vector<1x4x256xf32>
    tpu.vector_store %arg8[%c0_74, %c0_75, %c0_76], %213 {strides = array<i32>} : memref<1x4x256xf32, #tpu.memory_space<vmem>>, vector<1x4x256xf32>,
    %215 = arith.subf %22, %210 : vector<4x256xf32>
    %216 = vector.shape_cast %215 : vector<4x256xf32> to vector<1x4x256xf32>
    %c0_77 = arith.constant 0 : index
    %c0_78 = arith.constant 0 : index
    %c0_79 = arith.constant 0 : index
    %217 = vector.load %arg9[%c0_77, %c0_78, %c0_79] : memref<1x4x256xf32, #tpu.memory_space<vmem>>, vector<1x4x256xf32>
    tpu.vector_store %arg9[%c0_77, %c0_78, %c0_79], %216 {strides = array<i32>} : memref<1x4x256xf32, #tpu.memory_space<vmem>>, vector<1x4x256xf32>,
    return
  }
  func.func @transform_0(%arg0: i32) -> (i32, i32, i32) {
    %c0_i32 = arith.constant 0 : i32
    %c0_i32_0 = arith.constant 0 : i32
    %c0_i32_1 = arith.constant 0 : i32
    return %arg0, %c0_i32, %c0_i32_0 : i32, i32, i32
  }
  func.func @transform_1(%arg0: i32) -> (i32, i32, i32) {
    %c0_i32 = arith.constant 0 : i32
    %c0_i32_0 = arith.constant 0 : i32
    %c0_i32_1 = arith.constant 0 : i32
    return %arg0, %c0_i32, %c0_i32_0 : i32, i32, i32
  }
  func.func @transform_2(%arg0: i32) -> (i32, i32) {
    %c0_i32 = arith.constant 0 : i32
    %c0_i32_0 = arith.constant 0 : i32
    %c0_i32_1 = arith.constant 0 : i32
    return %c0_i32, %c0_i32_0 : i32, i32
  }
  func.func @transform_3(%arg0: i32) -> (i32, i32) {
    %c0_i32 = arith.constant 0 : i32
    %c0_i32_0 = arith.constant 0 : i32
    %c0_i32_1 = arith.constant 0 : i32
    return %c0_i32, %c0_i32_0 : i32, i32
  }
  func.func @transform_4(%arg0: i32) -> (i32, i32) {
    %c0_i32 = arith.constant 0 : i32
    %c0_i32_0 = arith.constant 0 : i32
    %c0_i32_1 = arith.constant 0 : i32
    return %c0_i32, %c0_i32_0 : i32, i32
  }
  func.func @transform_5(%arg0: i32) -> (i32, i32) {
    %c0_i32 = arith.constant 0 : i32
    %c0_i32_0 = arith.constant 0 : i32
    %c0_i32_1 = arith.constant 0 : i32
    return %c0_i32, %c0_i32_0 : i32, i32
  }
  func.func @transform_6(%arg0: i32) -> (i32, i32) {
    %c0_i32 = arith.constant 0 : i32
    %c0_i32_0 = arith.constant 0 : i32
    %c0_i32_1 = arith.constant 0 : i32
    return %c0_i32, %c0_i32_0 : i32, i32
  }
  func.func @transform_7(%arg0: i32) -> (i32, i32, i32) {
    %c0_i32 = arith.constant 0 : i32
    %c0_i32_0 = arith.constant 0 : i32
    %c0_i32_1 = arith.constant 0 : i32
    return %arg0, %c0_i32, %c0_i32_0 : i32, i32, i32
  }
  func.func @transform_8(%arg0: i32) -> (i32, i32, i32) {
    %c0_i32 = arith.constant 0 : i32
    %c0_i32_0 = arith.constant 0 : i32
    %c0_i32_1 = arith.constant 0 : i32
    return %arg0, %c0_i32, %c0_i32_0 : i32, i32, i32
  }
  func.func @transform_9(%arg0: i32) -> (i32, i32, i32) {
    %c0_i32 = arith.constant 0 : i32
    %c0_i32_0 = arith.constant 0 : i32
    %c0_i32_1 = arith.constant 0 : i32
    return %arg0, %c0_i32, %c0_i32_0 : i32, i32, i32
  }
}

</mosaic_0001>

<llo_original>
// kernel: tpu_custom_call.1
$region0: #{tpu_custom_call.1}
  #allocation0 [shape = 'u32[]', space=smem, size = 0x4, offset = 0x4, fixed_abs, tag = 'smem constant byte address 0x4 - core index']
  #allocation1 [shape = 'u32[144,128]{1,0:T(1,128)}', space=vmem, size = 0x12000, scoped, tag = 'internal scratch']
  %s0 = inlined_call_operand.vmem [shape: f32[2,4,256], index: 0, kind: input, shape index: {}]
  %s1 = inlined_call_operand.vmem [shape: f32[2,4,256], index: 1, kind: input, shape index: {}]
  %s2 = inlined_call_operand.vmem [shape: f32[32,36], index: 2, kind: input, shape index: {}]
  %s3 = inlined_call_operand.vmem [shape: f32[32,1], index: 3, kind: input, shape index: {}]
  %s4 = inlined_call_operand.hbm [shape: f32[32,288], index: 4, kind: input, shape index: {}]
  %s5 = inlined_call_operand.vmem [shape: f32[32,1], index: 5, kind: input, shape index: {}]
  %s6 = inlined_call_operand.vmem [shape: f32[4,288], index: 6, kind: input, shape index: {}]
  %s7 = inlined_call_operand.hbm [shape: f32[2,4,256], index: 7, kind: output, shape index: {0}]
  %s8 = inlined_call_operand.hbm [shape: f32[2,4,256], index: 8, kind: output, shape index: {1}]
  %s9 = inlined_call_operand.hbm [shape: f32[2,4,256], index: 9, kind: output, shape index: {2}]
  %10 = xla_tuple %s7, %s8, %s9
  %s11 = sld [smem:[#allocation0]]
  $region81: #{tpu_custom_call.1} parent=0
    _
  %s13 = ssub.s32 1, %s11
  %s14 = scalar_select 0, %s13, %s11
  $region1: #{tpu_custom_call.1} parent=0
    #allocation2 [shape = 'u8[49152]{0}', space=vmem, size = 0xc000, scoped, tag = 'input window, operand 4, single buffered']
    #allocation3 [shape = 's32[2]{0}', space=sflag, size = 0x8, scoped, tag = 'scoped memory for tpu_custom_call.1']
    #allocation4 [shape = 's32[2]{0}', space=sflag, size = 0x8, scoped, tag = 'scoped memory for tpu_custom_call.1']
    #allocation5 [shape = 'u8[8192]{0}', space=vmem, size = 0x2000, scoped, tag = 'output window, operand 0']
    #allocation6 [shape = 'u8[8192]{0}', space=vmem, size = 0x2000, scoped, tag = 'output window, operand 1']
    #allocation7 [shape = 's32[2]{0}', space=sflag, size = 0x8, scoped, tag = 'scoped memory for tpu_custom_call.1']
    #allocation8 [shape = 'u8[8192]{0}', space=vmem, size = 0x2000, scoped, tag = 'output window, operand 2']
    %15 = vsyncpa [#allocation3], 0
    %16 = vsyncpa [#allocation4], 0
    %s17 = scalar_lea.sflag [#allocation4], 1
    %18 = vsyncpa %s17, 0
    %19 = vsyncpa [#allocation7], 0
    %s20 = scalar_lea.sflag [#allocation7], 1
    %21 = vsyncpa %s20, 0
    loop: start=0, step=1, limit=4
    $region2: #{tpu_custom_call.1} parent=1 // loop_pre_header
      _
    $region3: #{tpu_custom_call.1} parent=1 // loop_header
      %s23 = sphi 0, %s27
      %p24 = scmp.ge.s32.totalorder %s23, 4
      %s33 = sphi 0, %s35
      %s36 = sphi 0, %s33
      %s37 = sphi 0, %s36
      %s53 = sphi 0, %s37
      %s59 = sphi 0, %s61
      %s62 = sphi 0, %s59
      %s63 = sphi 0, %s62
      %s79 = sphi 0, %s63
      %s83 = sphi 0, %s83
      %s85 = sphi 0, %s83
      %s86 = sphi 0, %s85
      %s100 = sphi 0, %s86
      %s104 = sphi 0, %s104
      %s106 = sphi 0, %s104
      %s107 = sphi 0, %s106
      %s121 = sphi 0, %s107
      %s125 = sphi 0, %s125
      %s127 = sphi 0, %s125
      %s128 = sphi 0, %s127
      %s142 = sphi 0, %s128
      %s146 = sphi 0, %s146
      %s148 = sphi 0, %s146
      %s149 = sphi 0, %s148
      %s163 = sphi 0, %s149
      %s167 = sphi 0, %s167
      %s169 = sphi 0, %s167
      %s170 = sphi 0, %s169
      %s184 = sphi 0, %s170
      %s190 = sphi 0, %s192
      %s193 = sphi 0, %s190
      %s194 = sphi 0, %s193
      %s210 = sphi 0, %s194
      %s216 = sphi 0, %s218
      %s219 = sphi 0, %s216
      %s220 = sphi 0, %s219
      %s236 = sphi 0, %s220
      %s242 = sphi 0, %s244
      %s245 = sphi 0, %s242
      %s246 = sphi 0, %s245
      %s262 = sphi 0, %s246
    $region4: #{tpu_custom_call.1} parent=1 // loop_header_branch
      %26 = sbr.rel (%p24) target = $region8
    $region5: #{tpu_custom_call.1} parent=1 // loop_body
      %s28 = ssub.s32 %s23, 1
      %s29 = ssub.s32 %s23, 2
      %s30 = sadd.s32 %s23, 1
      %s31 = ssub.s32 %s23, %s30
      %p32 = scmp.eq.s32.totalorder %s31, 0
      %s34 = sadd.s32 %s33, 1
      %s35 = scalar_select %p32, %s33, %s34
      %p38 = pneg %p32
      %p39 = scmp.eq.s32.totalorder %s23, 1
      %p40 = por %p38, %p39
      %p41 = scmp.ne.s32.totalorder %s33, %s36
      %p42 = scmp.eq.s32.totalorder %s23, 0
      %p43 = por %p41, %p42
      %p44 = scmp.ne.s32.totalorder %s33, %s36
      %p45 = scmp.eq.s32.totalorder %s28, 1
      %p46 = por %p44, %p45
      %p47 = scmp.ne.s32.totalorder %s36, %s37
      %p48 = scmp.eq.s32.totalorder %s28, 0
      %p49 = por %p47, %p48
      %p50 = scmp.ne.s32.totalorder %s36, %s37
      %p51 = scmp.eq.s32.totalorder %s29, 1
      %p52 = por %p50, %p51
      %p54 = scmp.ne.s32.totalorder %s37, %s53
      %p55 = scmp.eq.s32.totalorder %s29, 0
      %p56 = por %p54, %p55
      %s57 = ssub.s32 %s23, %s30
      %p58 = scmp.eq.s32.totalorder %s57, 0
      %s60 = sadd.s32 %s59, 1
      %s61 = scalar_select %p58, %s59, %s60
      %p64 = pneg %p58
      %p65 = scmp.eq.s32.totalorder %s23, 1
      %p66 = por %p64, %p65
      %p67 = scmp.ne.s32.totalorder %s59, %s62
      %p68 = scmp.eq.s32.totalorder %s23, 0
      %p69 = por %p67, %p68
      %p70 = scmp.ne.s32.totalorder %s59, %s62
      %p71 = scmp.eq.s32.totalorder %s28, 1
      %p72 = por %p70, %p71
      %p73 = scmp.ne.s32.totalorder %s62, %s63
      %p74 = scmp.eq.s32.totalorder %s28, 0
      %p75 = por %p73, %p74
      %p76 = scmp.ne.s32.totalorder %s62, %s63
      %p77 = scmp.eq.s32.totalorder %s29, 1
      %p78 = por %p76, %p77
      %p80 = scmp.ne.s32.totalorder %s63, %s79
      %p81 = scmp.eq.s32.totalorder %s29, 0
      %p82 = por %p80, %p81
      %s84 = sadd.s32 %s83, 1
      %p87 = scmp.eq.s32.totalorder %s23, 1
      %p88 = scmp.ne.s32.totalorder %s83, %s85
      %p89 = scmp.eq.s32.totalorder %s23, 0
      %p90 = por %p88, %p89
      %p91 = scmp.ne.s32.totalorder %s83, %s85
      %p92 = scmp.eq.s32.totalorder %s28, 1
      %p93 = por %p91, %p92
      %p94 = scmp.ne.s32.totalorder %s85, %s86
      %p95 = scmp.eq.s32.totalorder %s28, 0
      %p96 = por %p94, %p95
      %p97 = scmp.ne.s32.totalorder %s85, %s86
      %p98 = scmp.eq.s32.totalorder %s29, 1
      %p99 = por %p97, %p98
      %p101 = scmp.ne.s32.totalorder %s86, %s100
      %p102 = scmp.eq.s32.totalorder %s29, 0
      %p103 = por %p101, %p102
      %s105 = sadd.s32 %s104, 1
      %p108 = scmp.eq.s32.totalorder %s23, 1
      %p109 = scmp.ne.s32.totalorder %s104, %s106
      %p110 = scmp.eq.s32.totalorder %s23, 0
      %p111 = por %p109, %p110
      %p112 = scmp.ne.s32.totalorder %s104, %s106
      %p113 = scmp.eq.s32.totalorder %s28, 1
      %p114 = por %p112, %p113
      %p115 = scmp.ne.s32.totalorder %s106, %s107
      %p116 = scmp.eq.s32.totalorder %s28, 0
      %p117 = por %p115, %p116
      %p118 = scmp.ne.s32.totalorder %s106, %s107
      %p119 = scmp.eq.s32.totalorder %s29, 1
      %p120 = por %p118, %p119
      %p122 = scmp.ne.s32.totalorder %s107, %s121
      %p123 = scmp.eq.s32.totalorder %s29, 0
      %p124 = por %p122, %p123
      %s126 = sadd.s32 %s125, 1
      %p129 = scmp.eq.s32.totalorder %s23, 1
      %p130 = scmp.ne.s32.totalorder %s125, %s127
      %p131 = scmp.eq.s32.totalorder %s23, 0
      %p132 = por %p130, %p131
      %p133 = scmp.ne.s32.totalorder %s125, %s127
      %p134 = scmp.eq.s32.totalorder %s28, 1
      %p135 = por %p133, %p134
      %p136 = scmp.ne.s32.totalorder %s127, %s128
      %p137 = scmp.eq.s32.totalorder %s28, 0
      %p138 = por %p136, %p137
      %p139 = scmp.ne.s32.totalorder %s127, %s128
      %p140 = scmp.eq.s32.totalorder %s29, 1
      %p141 = por %p139, %p140
      %p143 = scmp.ne.s32.totalorder %s128, %s142
      %p144 = scmp.eq.s32.totalorder %s29, 0
      %p145 = por %p143, %p144
      %s147 = sadd.s32 %s146, 1
      %p150 = scmp.eq.s32.totalorder %s23, 1
      %p151 = scmp.ne.s32.totalorder %s146, %s148
      %p152 = scmp.eq.s32.totalorder %s23, 0
      %p153 = por %p151, %p152
      %p154 = scmp.ne.s32.totalorder %s146, %s148
      %p155 = scmp.eq.s32.totalorder %s28, 1
      %p156 = por %p154, %p155
      %p157 = scmp.ne.s32.totalorder %s148, %s149
      %p158 = scmp.eq.s32.totalorder %s28, 0
      %p159 = por %p157, %p158
      %p160 = scmp.ne.s32.totalorder %s148, %s149
      %p161 = scmp.eq.s32.totalorder %s29, 1
      %p162 = por %p160, %p161
      %p164 = scmp.ne.s32.totalorder %s149, %s163
      %p165 = scmp.eq.s32.totalorder %s29, 0
      %p166 = por %p164, %p165
      %s168 = sadd.s32 %s167, 1
      %p171 = scmp.eq.s32.totalorder %s23, 1
      %p172 = scmp.ne.s32.totalorder %s167, %s169
      %p173 = scmp.eq.s32.totalorder %s23, 0
      %p174 = por %p172, %p173
      %p175 = scmp.ne.s32.totalorder %s167, %s169
      %p176 = scmp.eq.s32.totalorder %s28, 1
      %p177 = por %p175, %p176
      %p178 = scmp.ne.s32.totalorder %s169, %s170
      %p179 = scmp.eq.s32.totalorder %s28, 0
      %p180 = por %p178, %p179
      %p181 = scmp.ne.s32.totalorder %s169, %s170
      %p182 = scmp.eq.s32.totalorder %s29, 1
      %p183 = por %p181, %p182
      %p185 = scmp.ne.s32.totalorder %s170, %s184
      %p186 = scmp.eq.s32.totalorder %s29, 0
      %p187 = por %p185, %p186
      %s188 = ssub.s32 %s23, %s30
      %p189 = scmp.eq.s32.totalorder %s188, 0
      %s191 = sadd.s32 %s190, 1
      %s192 = scalar_select %p189, %s190, %s191
      %p195 = pneg %p189
      %p196 = scmp.eq.s32.totalorder %s23, 1
      %p197 = por %p195, %p196
      %p198 = scmp.ne.s32.totalorder %s190, %s193
      %p199 = scmp.eq.s32.totalorder %s23, 0
      %p200 = por %p198, %p199
      %p201 = scmp.ne.s32.totalorder %s190, %s193
      %p202 = scmp.eq.s32.totalorder %s28, 1
      %p203 = por %p201, %p202
      %p204 = scmp.ne.s32.totalorder %s193, %s194
      %p205 = scmp.eq.s32.totalorder %s28, 0
      %p206 = por %p204, %p205
      %p207 = scmp.ne.s32.totalorder %s193, %s194
      %p208 = scmp.eq.s32.totalorder %s29, 1
      %p209 = por %p207, %p208
      %p211 = scmp.ne.s32.totalorder %s194, %s210
      %p212 = scmp.eq.s32.totalorder %s29, 0
      %p213 = por %p211, %p212
      %s214 = ssub.s32 %s23, %s30
      %p215 = scmp.eq.s32.totalorder %s214, 0
      %s217 = sadd.s32 %s216, 1
      %s218 = scalar_select %p215, %s216, %s217
      %p221 = pneg %p215
      %p222 = scmp.eq.s32.totalorder %s23, 1
      %p223 = por %p221, %p222
      %p224 = scmp.ne.s32.totalorder %s216, %s219
      %p225 = scmp.eq.s32.totalorder %s23, 0
      %p226 = por %p224, %p225
      %p227 = scmp.ne.s32.totalorder %s216, %s219
      %p228 = scmp.eq.s32.totalorder %s28, 1
      %p229 = por %p227, %p228
      %p230 = scmp.ne.s32.totalorder %s219, %s220
      %p231 = scmp.eq.s32.totalorder %s28, 0
      %p232 = por %p230, %p231
      %p233 = scmp.ne.s32.totalorder %s219, %s220
      %p234 = scmp.eq.s32.totalorder %s29, 1
      %p235 = por %p233, %p234
      %p237 = scmp.ne.s32.totalorder %s220, %s236
      %p238 = scmp.eq.s32.totalorder %s29, 0
      %p239 = por %p237, %p238
      %s240 = ssub.s32 %s23, %s30
      %p241 = scmp.eq.s32.totalorder %s240, 0
      %s243 = sadd.s32 %s242, 1
      %s244 = scalar_select %p241, %s242, %s243
      %p247 = pneg %p241
      %p248 = scmp.eq.s32.totalorder %s23, 1
      %p249 = por %p247, %p248
      %p250 = scmp.ne.s32.totalorder %s242, %s245
      %p251 = scmp.eq.s32.totalorder %s23, 0
      %p252 = por %p250, %p251
      %p253 = scmp.ne.s32.totalorder %s242, %s245
      %p254 = scmp.eq.s32.totalorder %s28, 1
      %p255 = por %p253, %p254
      %p256 = scmp.ne.s32.totalorder %s245, %s246
      %p257 = scmp.eq.s32.totalorder %s28, 0
      %p258 = por %p256, %p257
      %p259 = scmp.ne.s32.totalorder %s245, %s246
      %p260 = scmp.eq.s32.totalorder %s29, 1
      %p261 = por %p259, %p260
      %p263 = scmp.ne.s32.totalorder %s246, %s262
      %p264 = scmp.eq.s32.totalorder %s29, 0
      %p265 = por %p263, %p264
      %p266 = scmp.le.s32.totalorder 1, %s23
      %p267 = scmp.lt.s32.totalorder %s23, 3
      %p268 = pnand %p266, %p267
      %p269 = pneg %p268
      // Predicated region
      $region9: #{tpu_custom_call.1} parent=5 // pred_check
        _
      $region10: #{tpu_custom_call.1} parent=5 // pred_check_branch
        %271 = sbr.rel (%p268) target = $region12
      $region11: #{tpu_custom_call.1} parent=5 // pred_region
        %s272 = ssub.s32 %s23, 1
        // Predicated region
        $region13: #{tpu_custom_call.1} parent=11 // pred_check
          %p273 = pneg %p96
        $region14: #{tpu_custom_call.1} parent=11 // pred_check_branch
          %275 = sbr.rel (%p273) target = $region16
        $region15: #{tpu_custom_call.1} parent=11 // pred_region
          _
        $region16: #{tpu_custom_call.1} parent=11 // pred_fallthru
          _
        // Predicated region
        $region17: #{tpu_custom_call.1} parent=11 // pred_check
          %p276 = pneg %p117
        $region18: #{tpu_custom_call.1} parent=11 // pred_check_branch
          %278 = sbr.rel (%p276) target = $region20
        $region19: #{tpu_custom_call.1} parent=11 // pred_region
          _
        $region20: #{tpu_custom_call.1} parent=11 // pred_fallthru
          _
        // Predicated region
        $region21: #{tpu_custom_call.1} parent=11 // pred_check
          %p279 = pneg %p138
        $region22: #{tpu_custom_call.1} parent=11 // pred_check_branch
          %281 = sbr.rel (%p279) target = $region24
        $region23: #{tpu_custom_call.1} parent=11 // pred_region
          %s283 = ssub.s32 1536, 1536
          %284 = vsyncadd [#allocation3], %s283
          %s285 = sshll.u32 [#allocation2], 4
          %s286 = int_to_ptr.vmem [resolvable:$true] %s285
          %291 = dma.hbm_to_vmem [thread:$0]  %s4, 1536, %s286, [#allocation3], 384, 384, 24
        $region24: #{tpu_custom_call.1} parent=11 // pred_fallthru
          _
        // Predicated region
        $region25: #{tpu_custom_call.1} parent=11 // pred_check
          %p292 = pneg %p159
        $region26: #{tpu_custom_call.1} parent=11 // pred_check_branch
          %294 = sbr.rel (%p292) target = $region28
        $region27: #{tpu_custom_call.1} parent=11 // pred_region
          _
        $region28: #{tpu_custom_call.1} parent=11 // pred_fallthru
          _
        // Predicated region
        $region29: #{tpu_custom_call.1} parent=11 // pred_check
          %p295 = pneg %p180
        $region30: #{tpu_custom_call.1} parent=11 // pred_check_branch
          %297 = sbr.rel (%p295) target = $region32
        $region31: #{tpu_custom_call.1} parent=11 // pred_region
          _
        $region32: #{tpu_custom_call.1} parent=11 // pred_fallthru
          _
      $region12: #{tpu_custom_call.1} parent=5 // pred_fallthru
        _
      %p298 = scmp.lt.s32.totalorder %s23, 2
      // Predicated region
      $region33: #{tpu_custom_call.1} parent=5 // pred_check
        %p299 = pneg %p298
      $region34: #{tpu_custom_call.1} parent=5 // pred_check_branch
        %301 = sbr.rel (%p299) target = $region36
      $region35: #{tpu_custom_call.1} parent=5 // pred_region
        // Predicated region
        $region37: #{tpu_custom_call.1} parent=35 // pred_check
          %p302 = pneg %p43
        $region38: #{tpu_custom_call.1} parent=35 // pred_check_branch
          %304 = sbr.rel (%p302) target = $region40
        $region39: #{tpu_custom_call.1} parent=35 // pred_region
          %p305 = scmp.lt.s32.totalorder %s23, 1
          %s306 = scalar_select %p305, %s23, 1
          %s307 = smul.addr %s306, 2
          %s308 = smul.addr %s307, 4
          %s309 = scalar_lea.vmem %s0, %s308
        $region40: #{tpu_custom_call.1} parent=35 // pred_fallthru
          _
        // Predicated region
        $region41: #{tpu_custom_call.1} parent=35 // pred_check
          %p310 = pneg %p69
        $region42: #{tpu_custom_call.1} parent=35 // pred_check_branch
          %312 = sbr.rel (%p310) target = $region44
        $region43: #{tpu_custom_call.1} parent=35 // pred_region
          %p313 = scmp.lt.s32.totalorder %s23, 1
          %s314 = scalar_select %p313, %s23, 1
          %s315 = smul.addr %s314, 2
          %s316 = smul.addr %s315, 4
          %s317 = scalar_lea.vmem %s1, %s316
        $region44: #{tpu_custom_call.1} parent=35 // pred_fallthru
          _
      $region36: #{tpu_custom_call.1} parent=5 // pred_fallthru
        _
      %p318 = scmp.le.s32.totalorder 1, %s23
      %p319 = scmp.lt.s32.totalorder %s23, 3
      %p320 = pnand %p318, %p319
      %p321 = pneg %p320
      // Predicated region
      $region45: #{tpu_custom_call.1} parent=5 // pred_check
        _
      $region46: #{tpu_custom_call.1} parent=5 // pred_check_branch
        %323 = sbr.rel (%p320) target = $region48
      $region47: #{tpu_custom_call.1} parent=5 // pred_region
        %s324 = ssub.s32 %s23, 1
        // Predicated region
        $region49: #{tpu_custom_call.1} parent=47 // pred_check
          %p325 = pneg %p138
        $region50: #{tpu_custom_call.1} parent=47 // pred_check_branch
          %327 = sbr.rel (%p325) target = $region52
        $region51: #{tpu_custom_call.1} parent=47 // pred_region
          %328 = dma.done [#allocation3], 1536
        $region52: #{tpu_custom_call.1} parent=47 // pred_fallthru
          _
        %p329 = scmp.lt.s32.totalorder %s28, 1
        %s330 = scalar_select %p329, %s28, 1
        %s331 = smul.addr %s330, 2
        %s332 = smul.addr %s331, 4
        %s333 = scalar_lea.vmem %s0, %s332
        %p334 = pneg %p49
        %p335 = pneg %p46
        %p336 = scmp.lt.s32.totalorder %s28, 1
        %s337 = scalar_select %p336, %s28, 1
        %s338 = smul.addr %s337, 2
        %s339 = smul.addr %s338, 4
        %s340 = scalar_lea.vmem %s1, %s339
        %p341 = pneg %p75
        %p342 = pneg %p72
        %p343 = pneg %p96
        %p344 = pneg %p93
        %p345 = pneg %p117
        %p346 = pneg %p114
        %p347 = pneg %p138
        %p348 = pneg %p135
        %p349 = pneg %p159
        %p350 = pneg %p156
        %p351 = pneg %p180
        %p352 = pneg %p177
        %p353 = pneg %p206
        %p354 = pneg %p203
        %s355 = sand.u32 %s193, 1
        %s356 = scalar_lea.sflag [#allocation4], %s355
        %s357 = sand.u32 %s193, 1
        %s358 = smul.addr %s357, 8
        %s359 = scalar_lea.vmem [#allocation5], %s358
        %p360 = pneg %p232
        %p361 = pneg %p229
        %s362 = sand.u32 %s28, 1
        %s363 = scalar_lea.sflag [#allocation7], %s362
        %s364 = sand.u32 %s219, 1
        %s365 = smul.addr %s364, 8
        %s366 = scalar_lea.vmem [#allocation6], %s365
        %p367 = pneg %p258
        %p368 = pneg %p255
        %s369 = sand.u32 %s28, 1
        %s370 = scalar_lea.sflag [#allocation7], %s369
        %s371 = sand.u32 %s245, 1
        %s372 = smul.addr %s371, 8
        %s373 = scalar_lea.vmem [#allocation8], %s372
        %p374 = scmp.lt.s32.totalorder %s28, 1
        %s375 = scalar_select %p374, %s28, 1
        %s376 = smul.addr %s375, 2
        %s377 = smul.addr %s376, 4
        %s378 = scalar_lea.vmem %s0, %s377
        %p379 = scmp.lt.s32.totalorder %s28, 1
        %s380 = scalar_select %p379, %s28, 1
        %s381 = smul.addr %s380, 2
        %s382 = smul.addr %s381, 4
        %s383 = scalar_lea.vmem %s1, %s382
        %v384 = vlaneseq
        %v385 = vand.u32 %v384, 127
        %v386 = vadd.s32 %v385, 128
        %vm387 = vcmp.lt.s32.totalorder %v385, 0
        %v388 = vsub.s32 0, %v385
        %v389 = vsel %vm387, %v388, %v385
        %v390 = vshrl.u32 %v389, 4
        %v391 = vand.u32 %v389, 15
        %v392 = vsub.s32 0, %v391
        %v393 = vsel %vm387, %v392, %v391
        %vm394 = vcmp.lt.s32.totalorder %v386, 0
        %v395 = vsub.s32 0, %v386
        %v396 = vsel %vm394, %v395, %v386
        %v397 = vshrl.u32 %v396, 4
        %v398 = vand.u32 %v396, 15
        %v399 = vsub.s32 0, %v398
        %v400 = vsel %vm394, %v399, %v398
        %vm401 = vcmp.ne.s32.totalorder %v393, 0
        %vm402 = vcmp.ne.s32.totalorder %v400, 0
        %vm403 = vcmp.lt.s32.totalorder %v393, 0
        %vm404 = vcmp.lt.s32.totalorder %v400, 0
        %vm405 = vmand %vm403, %vm401
        %vm406 = vmand %vm404, %vm402
        %v407 = vadd.s32 %v393, 16
        %v408 = vadd.s32 %v400, 16
        %v409 = vsel %vm405, %v407, %v393
        %v410 = vsel %vm406, %v408, %v400
        %vm411 = vcmp.ge.s32.totalorder %v409, 1
        %vm412 = vcmp.ge.s32.totalorder %v410, 1
        %vm413 = vcmp.le.s32.totalorder %v409, 14
        %vm414 = vcmp.le.s32.totalorder %v410, 14
        %v415 = vld [vmem:[%s378] sm:$0xff]
        %v416 = vld [vmem:[%s2] sm:$0xff]
        %v417 = vld [vmem:[%s2 + $0x8] sm:$0xff]
        %v418 = vld [vmem:[%s2 + $0x10] sm:$0xff]
        %v419 = vld [vmem:[%s2 + $0x18] sm:$0xff]
        %v420 = vld [vmem:[%s3] sm:$0xff]
        %v421 = vld [vmem:[%s3 + $0x8] sm:$0xff]
        %v422 = vld [vmem:[%s3 + $0x10] sm:$0xff]
        %v423 = vld [vmem:[%s3 + $0x18] sm:$0xff]
        %v425 = vcombine.high %v415, %v415
        %426 = vrot.lane.b32.xlu0 %v415, 17
        %v427 = vpop.permute.xlu0 %426
        %428 = vrot.lane.b32.xlu0 %v425, 17
        %v429 = vpop.permute.xlu0 %428
        %vm430 = vcmask 138240
        %v431 = vsel %vm430, %v427, %v429
        %v434 = vsel %vm430, 0.0, %v427
        %v435 = vsel %vm411, 1, 0
        %v436 = vsel %vm412, 1, 0
        %vm437 = vcmp.eq.s32.totalorder %v435, 1
        %vm438 = vcmp.eq.s32.totalorder %v436, 1
        %v439 = vsel %vm437, %v434, 0.0
        %v440 = vsel %vm438, %v431, 0.0
        %441 = vrot.lane.b32.xlu0 %v415, 16
        %v442 = vpop.permute.xlu0 %441
        %443 = vrot.lane.b32.xlu0 %v425, 16
        %v444 = vpop.permute.xlu0 %443
        %vm445 = vcmask 130048
        %v446 = vsel %vm445, %v442, %v444
        %v448 = vsel %vm445, 0.0, %v442
        %449 = vrot.lane.b32.xlu0 %v415, 15
        %v450 = vpop.permute.xlu0 %449
        %451 = vrot.lane.b32.xlu0 %v425, 15
        %v452 = vpop.permute.xlu0 %451
        %vm453 = vcmask 121856
        %v454 = vsel %vm453, %v450, %v452
        %v457 = vsel %vm453, 0.0, %v450
        %v458 = vsel %vm413, 1, 0
        %v459 = vsel %vm414, 1, 0
        %vm460 = vcmp.eq.s32.totalorder %v458, 1
        %vm461 = vcmp.eq.s32.totalorder %v459, 1
        %v462 = vsel %vm460, %v457, 0.0
        %v463 = vsel %vm461, %v454, 0.0
        %464 = vrot.lane.b32.xlu0 %v415, 1
        %v465 = vpop.permute.xlu0 %464
        %466 = vrot.lane.b32.xlu0 %v425, 1
        %v467 = vpop.permute.xlu0 %466
        %vm468 = vcmask 7168
        %v469 = vsel %vm468, %v465, %v467
        %v472 = vsel %vm468, 0.0, %v465
        %v473 = vsel %vm437, %v472, 0.0
        %v474 = vsel %vm438, %v469, 0.0
        %475 = vrot.lane.b32.xlu0 %v415, 127
        %v476 = vpop.permute.xlu0 %475
        %477 = vrot.lane.b32.xlu0 %v425, 127
        %v478 = vpop.permute.xlu0 %477
        %vm479 = vcmask 1039360
        %v480 = vsel %vm479, %v476, %v478
        %v483 = vsel %vm479, %v478, 0.0
        %v484 = vsel %vm460, %v480, 0.0
        %v485 = vsel %vm461, %v483, 0.0
        %486 = vrot.lane.b32.xlu0 %v415, 113
        %v487 = vpop.permute.xlu0 %486
        %488 = vrot.lane.b32.xlu0 %v425, 113
        %v489 = vpop.permute.xlu0 %488
        %vm490 = vcmask 924672
        %v491 = vsel %vm490, %v487, %v489
        %v494 = vsel %vm490, %v489, 0.0
        %v495 = vsel %vm437, %v491, 0.0
        %v496 = vsel %vm438, %v494, 0.0
        %497 = vrot.lane.b32.xlu0 %v415, 112
        %v498 = vpop.permute.xlu0 %497
        %499 = vrot.lane.b32.xlu0 %v425, 112
        %v500 = vpop.permute.xlu0 %499
        %vm501 = vcmask 916480
        %v502 = vsel %vm501, %v498, %v500
        %v504 = vsel %vm501, %v500, 0.0
        %505 = vrot.lane.b32.xlu0 %v415, 111
        %v506 = vpop.permute.xlu0 %505
        %507 = vrot.lane.b32.xlu0 %v425, 111
        %v508 = vpop.permute.xlu0 %507
        %vm509 = vcmask 908288
        %v510 = vsel %vm509, %v506, %v508
        %v513 = vsel %vm509, %v508, 0.0
        %v514 = vsel %vm460, %v510, 0.0
        %v515 = vsel %vm461, %v513, 0.0
        %v517 = vrot.slane %v448, 4
        %v518 = vrot.slane %v446, 4
        %v523 = vrot.slane %v473, 4
        %v524 = vrot.slane %v474, 4
        %v530 = vrot.slane %v484, 4
        %v531 = vrot.slane %v485, 4
        %v535 = vrot.slane %v502, 4
        %v536 = vrot.slane %v504, 4
        %vm539 = vcmask 1043456
        %v540 = vsel %vm539, %v439, %v517
        %v541 = vsel %vm539, %v440, %v518
        %v542 = vsel %vm539, %v462, %v523
        %v543 = vsel %vm539, %v463, %v524
        %v544 = vsel %vm539, %v415, %v530
        %v545 = vsel %vm539, %v425, %v531
        %v546 = vsel %vm539, %v495, %v535
        %v547 = vsel %vm539, %v496, %v536
        %549 = vset.pattern.permute.xlu0 0
        %550 = vperm.xlu0 %549, %v420
        %v551 = vpop.permute.xlu0 %550
        %554 = vset.pattern.permute.xlu0 0
        %555 = vperm.xlu0 %554, %v421
        %v556 = vpop.permute.xlu0 %555
        %559 = vset.pattern.permute.xlu0 0
        %560 = vperm.xlu0 %559, %v422
        %v561 = vpop.permute.xlu0 %560
        %564 = vset.pattern.permute.xlu0 0
        %565 = vperm.xlu0 %564, %v423
        %v566 = vpop.permute.xlu0 %565
        %vm568 = vcmask 293888
        %v570 = vsel %vm568, %v416, 0
        %v573 = vsel %vm568, %v417, 0
        %v576 = vsel %vm568, %v418, 0
        %v579 = vsel %vm568, %v419, 0
        %v582 = vsel %vm539, %v514, 0
        %v585 = vsel %vm539, %v515, 0
        %587 = vmatprep.subr.mxu0 %v541
        %588 = vmatpush1.msra.mxu0 %v540
        %589 = vmatprep.subr.mxu0 %v543
        %590 = vmatpush1.msra.mxu0 %v542
        %591 = vmatprep.subr.mxu0 %v545
        %592 = vmatpush1.msra.mxu0 %v544
        %593 = vmatprep.subr.mxu0 %v547
        %594 = vmatpush1.msra.mxu0 %v546
        %595 = vmatprep.subr.mxu0 %v585
        %596 = vmatpush1.msra.mxu0 %v582
        %597 = vmatprep.subr.mxu0 0.0
        %598 = vmatpush1.msra.mxu0 0.0
        %599 = vmatprep.subr.mxu0 0.0
        %600 = vmatpush1.msra.mxu0 0.0
        %601 = vmatprep.subr.mxu0 0.0
        %602 = vmatpush1.msra.mxu0 0.0
        %603 = vmatprep.subr.mxu0 0.0
        %604 = vmatpush1.msra.mxu0 0.0
        %605 = vmatprep.subr.mxu0 0.0
        %606 = vmatpush1.msra.mxu0 0.0
        %607 = vmatprep.subr.mxu0 0.0
        %608 = vmatpush1.msra.mxu0 0.0
        %609 = vmatprep.subr.mxu0 0.0
        %610 = vmatpush1.msra.mxu0 0.0
        %611 = vmatprep.subr.mxu0 0.0
        %612 = vmatpush1.msra.mxu0 0.0
        %613 = vmatprep.subr.mxu0 0.0
        %614 = vmatpush1.msra.mxu0 0.0
        %615 = vmatprep.subr.mxu0 0.0
        %616 = vmatpush1.msra.mxu0 0.0
        %617 = vmatprep.subr.mxu0 0.0
        %618 = vmatpush1.msra.mxu0 0.0
        %619 = vmatprep.subr.mxu0 0.0
        %620 = vmatpush1.msra.mxu0 0.0
        %621 = vmatprep.subr.mxu0 0.0
        %622 = vmatpush1.msra.mxu0 0.0
        %623 = vmatprep.subr.mxu0 0.0
        %624 = vmatpush1.msra.mxu0 0.0
        %625 = vmatprep.subr.mxu0 0.0
        %626 = vmatpush1.msra.mxu0 0.0
        %627 = vmatprep.subr.mxu0 0.0
        %628 = vmatpush1.msra.mxu0 0.0
        %629 = vmatprep.subr.mxu0 0.0
        %630 = vmatpush1.msra.mxu0 0.0
        %631 = vmatprep.subr.mxu0 0.0
        %632 = vmatpush1.msra.mxu0 0.0
        %633 = vmatprep.subr.mxu0 0.0
        %634 = vmatpush1.msra.mxu0 0.0
        %635 = vmatprep.subr.mxu0 0.0
        %636 = vmatpush1.msra.mxu0 0.0
        %637 = vmatprep.subr.mxu0 0.0
        %638 = vmatpush1.msra.mxu0 0.0
        %639 = vmatprep.subr.mxu0 0.0
        %640 = vmatpush1.msra.mxu0 0.0
        %641 = vmatprep.subr.mxu0 0.0
        %642 = vmatpush1.msra.mxu0 0.0
        %643 = vmatprep.subr.mxu0 0.0
        %644 = vmatpush1.msra.mxu0 0.0
        %645 = vmatprep.subr.mxu0 0.0
        %646 = vmatpush1.msra.mxu0 0.0
        %647 = vmatprep.subr.mxu0 0.0
        %648 = vmatpush1.msra.mxu0 0.0
        %649 = vmatprep.subr.mxu0 0.0
        %650 = vmatpush1.msra.mxu0 0.0
        %651 = vmatprep.mubr.f32.mxu0 0.0
        %652 = vmatmul.mubr.f32.gmra.mrb[0].mxu0 %v570
        %v653 = vpop.f32.mrb[0].mxu0
        %v654 = vadd.f32 %v551, %v653
        %v655 = vpop.f32.mrb[0].mxu0
        %v656 = vadd.f32 %v551, %v655
        %657 = vmatprep.mubr.f32.mxu0 0.0
        %658 = vmatmul.mubr.f32.gmra.mrb[0].mxu0 %v573
        %v659 = vpop.f32.mrb[0].mxu0
        %v660 = vadd.f32 %v556, %v659
        %v661 = vpop.f32.mrb[0].mxu0
        %v662 = vadd.f32 %v556, %v661
        %663 = vmatprep.mubr.f32.mxu0 0.0
        %664 = vmatmul.mubr.f32.gmra.mrb[0].mxu0 %v576
        %v665 = vpop.f32.mrb[0].mxu0
        %v666 = vadd.f32 %v561, %v665
        %v667 = vpop.f32.mrb[0].mxu0
        %v668 = vadd.f32 %v561, %v667
        %669 = vmatprep.mubr.f32.mxu0 0.0
        %670 = vmatmul.mubr.f32.gmra.mrb[0].mxu0 %v579
        %v671 = vpop.f32.mrb[0].mxu0
        %v672 = vadd.f32 %v566, %v671
        %v673 = vpop.f32.mrb[0].mxu0
        %v674 = vadd.f32 %v566, %v673
        %675 = vdwg.mxu0
        %v676 = vmax.f32 %v654, 0.0
        %v677 = vmax.f32 %v656, 0.0
        %v678 = vmax.f32 %v660, 0.0
        %v679 = vmax.f32 %v662, 0.0
        %v680 = vmax.f32 %v666, 0.0
        %v681 = vmax.f32 %v668, 0.0
        %v682 = vmax.f32 %v672, 0.0
        %v683 = vmax.f32 %v674, 0.0
        %v684 = vld [vmem:[#allocation2] sm:$0xff]
        %v685 = vld [vmem:[#allocation2 + $0x8] sm:$0xff]
        %v686 = vld [vmem:[#allocation2 + $0x10] sm:$0xff]
        %v687 = vld [vmem:[#allocation2 + $0x18] sm:$0xff]
        %v688 = vld [vmem:[#allocation2 + $0x20] sm:$0xff]
        %v689 = vld [vmem:[#allocation2 + $0x28] sm:$0xff]
        %v690 = vld [vmem:[#allocation2 + $0x30] sm:$0xff]
        %v691 = vld [vmem:[#allocation2 + $0x38] sm:$0xff]
        %v692 = vld [vmem:[#allocation2 + $0x40] sm:$0xff]
        %v693 = vld [vmem:[#allocation2 + $0x48] sm:$0xff]
        %v694 = vld [vmem:[#allocation2 + $0x50] sm:$0xff]
        %v695 = vld [vmem:[#allocation2 + $0x58] sm:$0xff]
        %v696 = vld [vmem:[%s5] sm:$0xff]
        %v697 = vld [vmem:[%s5 + $0x8] sm:$0xff]
        %v698 = vld [vmem:[%s5 + $0x10] sm:$0xff]
        %v699 = vld [vmem:[%s5 + $0x18] sm:$0xff]
        %708 = vrot.lane.b32.xlu0 %v676, 17
        %v709 = vpop.permute.xlu0 %708
        %710 = vrot.lane.b32.xlu0 %v677, 17
        %v711 = vpop.permute.xlu0 %710
        %712 = vrot.lane.b32.xlu0 %v678, 17
        %v713 = vpop.permute.xlu0 %712
        %714 = vrot.lane.b32.xlu0 %v679, 17
        %v715 = vpop.permute.xlu0 %714
        %716 = vrot.lane.b32.xlu0 %v680, 17
        %v717 = vpop.permute.xlu0 %716
        %718 = vrot.lane.b32.xlu0 %v681, 17
        %v719 = vpop.permute.xlu0 %718
        %720 = vrot.lane.b32.xlu0 %v682, 17
        %v721 = vpop.permute.xlu0 %720
        %722 = vrot.lane.b32.xlu0 %v683, 17
        %v723 = vpop.permute.xlu0 %722
        %v724 = vsel %vm430, %v709, %v711
        %v725 = vsel %vm430, %v713, %v715
        %v726 = vsel %vm430, %v717, %v719
        %v727 = vsel %vm430, %v721, %v723
        %v736 = vsel %vm430, 0.0, %v709
        %v737 = vsel %vm430, 0.0, %v713
        %v738 = vsel %vm430, 0.0, %v717
        %v739 = vsel %vm430, 0.0, %v721
        %v740 = vsel %vm437, %v736, 0.0
        %v741 = vsel %vm438, %v724, 0.0
        %v742 = vsel %vm437, %v737, 0.0
        %v743 = vsel %vm438, %v725, 0.0
        %v744 = vsel %vm437, %v738, 0.0
        %v745 = vsel %vm438, %v726, 0.0
        %v746 = vsel %vm437, %v739, 0.0
        %v747 = vsel %vm438, %v727, 0.0
        %748 = vrot.lane.b32.xlu0 %v676, 16
        %v749 = vpop.permute.xlu0 %748
        %750 = vrot.lane.b32.xlu0 %v677, 16
        %v751 = vpop.permute.xlu0 %750
        %752 = vrot.lane.b32.xlu0 %v678, 16
        %v753 = vpop.permute.xlu0 %752
        %754 = vrot.lane.b32.xlu0 %v679, 16
        %v755 = vpop.permute.xlu0 %754
        %756 = vrot.lane.b32.xlu0 %v680, 16
        %v757 = vpop.permute.xlu0 %756
        %758 = vrot.lane.b32.xlu0 %v681, 16
        %v759 = vpop.permute.xlu0 %758
        %760 = vrot.lane.b32.xlu0 %v682, 16
        %v761 = vpop.permute.xlu0 %760
        %762 = vrot.lane.b32.xlu0 %v683, 16
        %v763 = vpop.permute.xlu0 %762
        %v764 = vsel %vm445, %v749, %v751
        %v765 = vsel %vm445, %v753, %v755
        %v766 = vsel %vm445, %v757, %v759
        %v767 = vsel %vm445, %v761, %v763
        %v776 = vsel %vm445, 0.0, %v749
        %v777 = vsel %vm445, 0.0, %v753
        %v778 = vsel %vm445, 0.0, %v757
        %v779 = vsel %vm445, 0.0, %v761
        %780 = vrot.lane.b32.xlu0 %v676, 15
        %v781 = vpop.permute.xlu0 %780
        %782 = vrot.lane.b32.xlu0 %v677, 15
        %v783 = vpop.permute.xlu0 %782
        %784 = vrot.lane.b32.xlu0 %v678, 15
        %v785 = vpop.permute.xlu0 %784
        %786 = vrot.lane.b32.xlu0 %v679, 15
        %v787 = vpop.permute.xlu0 %786
        %788 = vrot.lane.b32.xlu0 %v680, 15
        %v789 = vpop.permute.xlu0 %788
        %790 = vrot.lane.b32.xlu0 %v681, 15
        %v791 = vpop.permute.xlu0 %790
        %792 = vrot.lane.b32.xlu0 %v682, 15
        %v793 = vpop.permute.xlu0 %792
        %794 = vrot.lane.b32.xlu0 %v683, 15
        %v795 = vpop.permute.xlu0 %794
        %v796 = vsel %vm453, %v781, %v783
        %v797 = vsel %vm453, %v785, %v787
        %v798 = vsel %vm453, %v789, %v791
        %v799 = vsel %vm453, %v793, %v795
        %v808 = vsel %vm453, 0.0, %v781
        %v809 = vsel %vm453, 0.0, %v785
        %v810 = vsel %vm453, 0.0, %v789
        %v811 = vsel %vm453, 0.0, %v793
        %v812 = vsel %vm460, %v808, 0.0
        %v813 = vsel %vm461, %v796, 0.0
        %v814 = vsel %vm460, %v809, 0.0
        %v815 = vsel %vm461, %v797, 0.0
        %v816 = vsel %vm460, %v810, 0.0
        %v817 = vsel %vm461, %v798, 0.0
        %v818 = vsel %vm460, %v811, 0.0
        %v819 = vsel %vm461, %v799, 0.0
        %820 = vrot.lane.b32.xlu0 %v676, 1
        %v821 = vpop.permute.xlu0 %820
        %822 = vrot.lane.b32.xlu0 %v677, 1
        %v823 = vpop.permute.xlu0 %822
        %824 = vrot.lane.b32.xlu0 %v678, 1
        %v825 = vpop.permute.xlu0 %824
        %826 = vrot.lane.b32.xlu0 %v679, 1
        %v827 = vpop.permute.xlu0 %826
        %828 = vrot.lane.b32.xlu0 %v680, 1
        %v829 = vpop.permute.xlu0 %828
        %830 = vrot.lane.b32.xlu0 %v681, 1
        %v831 = vpop.permute.xlu0 %830
        %832 = vrot.lane.b32.xlu0 %v682, 1
        %v833 = vpop.permute.xlu0 %832
        %834 = vrot.lane.b32.xlu0 %v683, 1
        %v835 = vpop.permute.xlu0 %834
        %v836 = vsel %vm468, %v821, %v823
        %v837 = vsel %vm468, %v825, %v827
        %v838 = vsel %vm468, %v829, %v831
        %v839 = vsel %vm468, %v833, %v835
        %v848 = vsel %vm468, 0.0, %v821
        %v849 = vsel %vm468, 0.0, %v825
        %v850 = vsel %vm468, 0.0, %v829
        %v851 = vsel %vm468, 0.0, %v833
        %v852 = vsel %vm437, %v848, 0.0
        %v853 = vsel %vm438, %v836, 0.0
        %v854 = vsel %vm437, %v849, 0.0
        %v855 = vsel %vm438, %v837, 0.0
        %v856 = vsel %vm437, %v850, 0.0
        %v857 = vsel %vm438, %v838, 0.0
        %v858 = vsel %vm437, %v851, 0.0
        %v859 = vsel %vm438, %v839, 0.0
        %860 = vrot.lane.b32.xlu0 %v676, 127
        %v861 = vpop.permute.xlu0 %860
        %862 = vrot.lane.b32.xlu0 %v677, 127
        %v863 = vpop.permute.xlu0 %862
        %864 = vrot.lane.b32.xlu0 %v678, 127
        %v865 = vpop.permute.xlu0 %864
        %866 = vrot.lane.b32.xlu0 %v679, 127
        %v867 = vpop.permute.xlu0 %866
        %868 = vrot.lane.b32.xlu0 %v680, 127
        %v869 = vpop.permute.xlu0 %868
        %870 = vrot.lane.b32.xlu0 %v681, 127
        %v871 = vpop.permute.xlu0 %870
        %872 = vrot.lane.b32.xlu0 %v682, 127
        %v873 = vpop.permute.xlu0 %872
        %874 = vrot.lane.b32.xlu0 %v683, 127
        %v875 = vpop.permute.xlu0 %874
        %v876 = vsel %vm479, %v861, %v863
        %v877 = vsel %vm479, %v865, %v867
        %v878 = vsel %vm479, %v869, %v871
        %v879 = vsel %vm479, %v873, %v875
        %v888 = vsel %vm479, %v863, 0.0
        %v889 = vsel %vm479, %v867, 0.0
        %v890 = vsel %vm479, %v871, 0.0
        %v891 = vsel %vm479, %v875, 0.0
        %v892 = vsel %vm460, %v876, 0.0
        %v893 = vsel %vm461, %v888, 0.0
        %v894 = vsel %vm460, %v877, 0.0
        %v895 = vsel %vm461, %v889, 0.0
        %v896 = vsel %vm460, %v878, 0.0
        %v897 = vsel %vm461, %v890, 0.0
        %v898 = vsel %vm460, %v879, 0.0
        %v899 = vsel %vm461, %v891, 0.0
        %900 = vrot.lane.b32.xlu0 %v676, 113
        %v901 = vpop.permute.xlu0 %900
        %902 = vrot.lane.b32.xlu0 %v677, 113
        %v903 = vpop.permute.xlu0 %902
        %904 = vrot.lane.b32.xlu0 %v678, 113
        %v905 = vpop.permute.xlu0 %904
        %906 = vrot.lane.b32.xlu0 %v679, 113
        %v907 = vpop.permute.xlu0 %906
        %908 = vrot.lane.b32.xlu0 %v680, 113
        %v909 = vpop.permute.xlu0 %908
        %910 = vrot.lane.b32.xlu0 %v681, 113
        %v911 = vpop.permute.xlu0 %910
        %912 = vrot.lane.b32.xlu0 %v682, 113
        %v913 = vpop.permute.xlu0 %912
        %914 = vrot.lane.b32.xlu0 %v683, 113
        %v915 = vpop.permute.xlu0 %914
        %v916 = vsel %vm490, %v901, %v903
        %v917 = vsel %vm490, %v905, %v907
        %v918 = vsel %vm490, %v909, %v911
        %v919 = vsel %vm490, %v913, %v915
        %v928 = vsel %vm490, %v903, 0.0
        %v929 = vsel %vm490, %v907, 0.0
        %v930 = vsel %vm490, %v911, 0.0
        %v931 = vsel %vm490, %v915, 0.0
        %v932 = vsel %vm437, %v916, 0.0
        %v933 = vsel %vm438, %v928, 0.0
        %v934 = vsel %vm437, %v917, 0.0
        %v935 = vsel %vm438, %v929, 0.0
        %v936 = vsel %vm437, %v918, 0.0
        %v937 = vsel %vm438, %v930, 0.0
        %v938 = vsel %vm437, %v919, 0.0
        %v939 = vsel %vm438, %v931, 0.0
        %940 = vrot.lane.b32.xlu0 %v676, 112
        %v941 = vpop.permute.xlu0 %940
        %942 = vrot.lane.b32.xlu0 %v677, 112
        %v943 = vpop.permute.xlu0 %942
        %944 = vrot.lane.b32.xlu0 %v678, 112
        %v945 = vpop.permute.xlu0 %944
        %946 = vrot.lane.b32.xlu0 %v679, 112
        %v947 = vpop.permute.xlu0 %946
        %948 = vrot.lane.b32.xlu0 %v680, 112
        %v949 = vpop.permute.xlu0 %948
        %950 = vrot.lane.b32.xlu0 %v681, 112
        %v951 = vpop.permute.xlu0 %950
        %952 = vrot.lane.b32.xlu0 %v682, 112
        %v953 = vpop.permute.xlu0 %952
        %954 = vrot.lane.b32.xlu0 %v683, 112
        %v955 = vpop.permute.xlu0 %954
        %v956 = vsel %vm501, %v941, %v943
        %v957 = vsel %vm501, %v945, %v947
        %v958 = vsel %vm501, %v949, %v951
        %v959 = vsel %vm501, %v953, %v955
        %v968 = vsel %vm501, %v943, 0.0
        %v969 = vsel %vm501, %v947, 0.0
        %v970 = vsel %vm501, %v951, 0.0
        %v971 = vsel %vm501, %v955, 0.0
        %972 = vrot.lane.b32.xlu0 %v676, 111
        %v973 = vpop.permute.xlu0 %972
        %974 = vrot.lane.b32.xlu0 %v677, 111
        %v975 = vpop.permute.xlu0 %974
        %976 = vrot.lane.b32.xlu0 %v678, 111
        %v977 = vpop.permute.xlu0 %976
        %978 = vrot.lane.b32.xlu0 %v679, 111
        %v979 = vpop.permute.xlu0 %978
        %980 = vrot.lane.b32.xlu0 %v680, 111
        %v981 = vpop.permute.xlu0 %980
        %982 = vrot.lane.b32.xlu0 %v681, 111
        %v983 = vpop.permute.xlu0 %982
        %984 = vrot.lane.b32.xlu0 %v682, 111
        %v985 = vpop.permute.xlu0 %984
        %986 = vrot.lane.b32.xlu0 %v683, 111
        %v987 = vpop.permute.xlu0 %986
        %v988 = vsel %vm509, %v973, %v975
        %v989 = vsel %vm509, %v977, %v979
        %v990 = vsel %vm509, %v981, %v983
        %v991 = vsel %vm509, %v985, %v987
        %v1000 = vsel %vm509, %v975, 0.0
        %v1001 = vsel %vm509, %v979, 0.0
        %v1002 = vsel %vm509, %v983, 0.0
        %v1003 = vsel %vm509, %v987, 0.0
        %v1004 = vsel %vm460, %v988, 0.0
        %v1005 = vsel %vm461, %v1000, 0.0
        %v1006 = vsel %vm460, %v989, 0.0
        %v1007 = vsel %vm461, %v1001, 0.0
        %v1008 = vsel %vm460, %v990, 0.0
        %v1009 = vsel %vm461, %v1002, 0.0
        %v1010 = vsel %vm460, %v991, 0.0
        %v1011 = vsel %vm461, %v1003, 0.0
        %1013 = vset.pattern.permute.xlu0 0
        %1014 = vperm.xlu0 %1013, %v696
        %v1015 = vpop.permute.xlu0 %1014
        %1018 = vset.pattern.permute.xlu0 0
        %1019 = vperm.xlu0 %1018, %v697
        %v1020 = vpop.permute.xlu0 %1019
        %1023 = vset.pattern.permute.xlu0 0
        %1024 = vperm.xlu0 %1023, %v698
        %v1025 = vpop.permute.xlu0 %1024
        %1028 = vset.pattern.permute.xlu0 0
        %1029 = vperm.xlu0 %1028, %v699
        %v1030 = vpop.permute.xlu0 %1029
        %vm1032 = vcmask 261120
        %v1034 = vsel %vm1032, %v686, 0
        %v1037 = vsel %vm1032, %v689, 0
        %v1040 = vsel %vm1032, %v692, 0
        %v1043 = vsel %vm1032, %v695, 0
        %1045 = vmatprep.subr.mxu0 %v741
        %1046 = vmatpush1.msra.mxu0 %v740
        %1047 = vmatprep.subr.mxu0 %v743
        %1048 = vmatpush1.msra.mxu0 %v742
        %1049 = vmatprep.subr.mxu0 %v745
        %1050 = vmatpush1.msra.mxu0 %v744
        %1051 = vmatprep.subr.mxu0 %v747
        %1052 = vmatpush1.msra.mxu0 %v746
        %1053 = vmatprep.subr.mxu0 %v764
        %1054 = vmatpush1.msra.mxu0 %v776
        %1055 = vmatprep.subr.mxu0 %v765
        %1056 = vmatpush1.msra.mxu0 %v777
        %1057 = vmatprep.subr.mxu0 %v766
        %1058 = vmatpush1.msra.mxu0 %v778
        %1059 = vmatprep.subr.mxu0 %v767
        %1060 = vmatpush1.msra.mxu0 %v779
        %1061 = vmatprep.subr.mxu0 %v813
        %1062 = vmatpush1.msra.mxu0 %v812
        %1063 = vmatprep.subr.mxu0 %v815
        %1064 = vmatpush1.msra.mxu0 %v814
        %1065 = vmatprep.subr.mxu0 %v817
        %1066 = vmatpush1.msra.mxu0 %v816
        %1067 = vmatprep.subr.mxu0 %v819
        %1068 = vmatpush1.msra.mxu0 %v818
        %1069 = vmatprep.subr.mxu0 %v853
        %1070 = vmatpush1.msra.mxu0 %v852
        %1071 = vmatprep.subr.mxu0 %v855
        %1072 = vmatpush1.msra.mxu0 %v854
        %1073 = vmatprep.subr.mxu0 %v857
        %1074 = vmatpush1.msra.mxu0 %v856
        %1075 = vmatprep.subr.mxu0 %v859
        %1076 = vmatpush1.msra.mxu0 %v858
        %1077 = vmatprep.subr.mxu0 %v677
        %1078 = vmatpush1.msra.mxu0 %v676
        %1079 = vmatprep.subr.mxu0 %v679
        %1080 = vmatpush1.msra.mxu0 %v678
        %1081 = vmatprep.subr.mxu0 %v681
        %1082 = vmatpush1.msra.mxu0 %v680
        %1083 = vmatprep.subr.mxu0 %v683
        %1084 = vmatpush1.msra.mxu0 %v682
        %1085 = vmatprep.subr.mxu0 %v893
        %1086 = vmatpush1.msra.mxu0 %v892
        %1087 = vmatprep.subr.mxu0 %v895
        %1088 = vmatpush1.msra.mxu0 %v894
        %1089 = vmatprep.subr.mxu0 %v897
        %1090 = vmatpush1.msra.mxu0 %v896
        %1091 = vmatprep.subr.mxu0 %v899
        %1092 = vmatpush1.msra.mxu0 %v898
        %1093 = vmatprep.subr.mxu0 %v933
        %1094 = vmatpush1.msra.mxu0 %v932
        %1095 = vmatprep.subr.mxu0 %v935
        %1096 = vmatpush1.msra.mxu0 %v934
        %1097 = vmatprep.subr.mxu0 %v937
        %1098 = vmatpush1.msra.mxu0 %v936
        %1099 = vmatprep.subr.mxu0 %v939
        %1100 = vmatpush1.msra.mxu0 %v938
        %1101 = vmatprep.subr.mxu0 %v968
        %1102 = vmatpush1.msra.mxu0 %v956
        %1103 = vmatprep.subr.mxu0 %v969
        %1104 = vmatpush1.msra.mxu0 %v957
        %1105 = vmatprep.subr.mxu0 %v970
        %1106 = vmatpush1.msra.mxu0 %v958
        %1107 = vmatprep.subr.mxu0 %v971
        %1108 = vmatpush1.msra.mxu0 %v959
        %1109 = vmatprep.mubr.f32.mxu0 %v685
        %1110 = vmatmul.mubr.f32.gmra.mrb[0].mxu0 %v684
        %v1111 = vpop.f32.mrb[0].mxu0
        %v1112 = vadd.f32 %v1015, %v1111
        %v1113 = vpop.f32.mrb[0].mxu0
        %v1114 = vadd.f32 %v1015, %v1113
        %1115 = vmatprep.mubr.f32.mxu0 %v688
        %1116 = vmatmul.mubr.f32.gmra.mrb[0].mxu0 %v687
        %v1117 = vpop.f32.mrb[0].mxu0
        %v1118 = vadd.f32 %v1020, %v1117
        %v1119 = vpop.f32.mrb[0].mxu0
        %v1120 = vadd.f32 %v1020, %v1119
        %1121 = vmatprep.mubr.f32.mxu0 %v691
        %1122 = vmatmul.mubr.f32.gmra.mrb[0].mxu0 %v690
        %v1123 = vpop.f32.mrb[0].mxu0
        %v1124 = vadd.f32 %v1025, %v1123
        %v1125 = vpop.f32.mrb[0].mxu0
        %v1126 = vadd.f32 %v1025, %v1125
        %1127 = vmatprep.mubr.f32.mxu0 %v694
        %1128 = vmatmul.mubr.f32.gmra.mrb[0].mxu0 %v693
        %v1129 = vpop.f32.mrb[0].mxu0
        %v1130 = vadd.f32 %v1030, %v1129
        %v1131 = vpop.f32.mrb[0].mxu0
        %v1132 = vadd.f32 %v1030, %v1131
        %1133 = vdwg.mxu0
        %1134 = vmatprep.subr.mxu0 %v1005
        %1135 = vmatpush1.msra.mxu0 %v1004
        %1136 = vmatprep.subr.mxu0 %v1007
        %1137 = vmatpush1.msra.mxu0 %v1006
        %1138 = vmatprep.subr.mxu0 %v1009
        %1139 = vmatpush1.msra.mxu0 %v1008
        %1140 = vmatprep.subr.mxu0 %v1011
        %1141 = vmatpush1.msra.mxu0 %v1010
        %1142 = vmatprep.subr.mxu0 0.0
        %1143 = vmatpush1.msra.mxu0 0.0
        %1144 = vmatprep.subr.mxu0 0.0
        %1145 = vmatpush1.msra.mxu0 0.0
        %1146 = vmatprep.subr.mxu0 0.0
        %1147 = vmatpush1.msra.mxu0 0.0
        %1148 = vmatprep.subr.mxu0 0.0
        %1149 = vmatpush1.msra.mxu0 0.0
        %1150 = vmatprep.subr.mxu0 0.0
        %1151 = vmatpush1.msra.mxu0 0.0
        %1152 = vmatprep.subr.mxu0 0.0
        %1153 = vmatpush1.msra.mxu0 0.0
        %1154 = vmatprep.subr.mxu0 0.0
        %1155 = vmatpush1.msra.mxu0 0.0
        %1156 = vmatprep.subr.mxu0 0.0
        %1157 = vmatpush1.msra.mxu0 0.0
        %1158 = vmatprep.subr.mxu0 0.0
        %1159 = vmatpush1.msra.mxu0 0.0
        %1160 = vmatprep.subr.mxu0 0.0
        %1161 = vmatpush1.msra.mxu0 0.0
        %1162 = vmatprep.subr.mxu0 0.0
        %1163 = vmatpush1.msra.mxu0 0.0
        %1164 = vmatprep.subr.mxu0 0.0
        %1165 = vmatpush1.msra.mxu0 0.0
        %1166 = vmatprep.subr.mxu0 0.0
        %1167 = vmatpush1.msra.mxu0 0.0
        %1168 = vmatprep.subr.mxu0 0.0
        %1169 = vmatpush1.msra.mxu0 0.0
        %1170 = vmatprep.subr.mxu0 0.0
        %1171 = vmatpush1.msra.mxu0 0.0
        %1172 = vmatprep.subr.mxu0 0.0
        %1173 = vmatpush1.msra.mxu0 0.0
        %1174 = vmatprep.subr.mxu0 0.0
        %1175 = vmatpush1.msra.mxu0 0.0
        %1176 = vmatprep.subr.mxu0 0.0
        %1177 = vmatpush1.msra.mxu0 0.0
        %1178 = vmatprep.subr.mxu0 0.0
        %1179 = vmatpush1.msra.mxu0 0.0
        %1180 = vmatprep.subr.mxu0 0.0
        %1181 = vmatpush1.msra.mxu0 0.0
        %1182 = vmatprep.subr.mxu0 0.0
        %1183 = vmatpush1.msra.mxu0 0.0
        %1184 = vmatprep.subr.mxu0 0.0
        %1185 = vmatpush1.msra.mxu0 0.0
        %1186 = vmatprep.subr.mxu0 0.0
        %1187 = vmatpush1.msra.mxu0 0.0
        %1188 = vmatprep.subr.mxu0 0.0
        %1189 = vmatpush1.msra.mxu0 0.0
        %1190 = vmatprep.subr.mxu0 0.0
        %1191 = vmatpush1.msra.mxu0 0.0
        %1192 = vmatprep.subr.mxu0 0.0
        %1193 = vmatpush1.msra.mxu0 0.0
        %1194 = vmatprep.subr.mxu0 0.0
        %1195 = vmatpush1.msra.mxu0 0.0
        %1196 = vmatprep.subr.mxu0 0.0
        %1197 = vmatpush1.msra.mxu0 0.0
        %1198 = vmatprep.mubr.f32.mxu0 0.0
        %1199 = vmatmul.mubr.f32.gmra.mrb[0].mxu0 %v1034
        %v1200 = vpop.f32.mrb[0].mxu0
        %v1201 = vadd.f32 %v1112, %v1200
        %v1202 = vpop.f32.mrb[0].mxu0
        %v1203 = vadd.f32 %v1114, %v1202
        %1204 = vmatprep.mubr.f32.mxu0 0.0
        %1205 = vmatmul.mubr.f32.gmra.mrb[0].mxu0 %v1037
        %v1206 = vpop.f32.mrb[0].mxu0
        %v1207 = vadd.f32 %v1118, %v1206
        %v1208 = vpop.f32.mrb[0].mxu0
        %v1209 = vadd.f32 %v1120, %v1208
        %1210 = vmatprep.mubr.f32.mxu0 0.0
        %1211 = vmatmul.mubr.f32.gmra.mrb[0].mxu0 %v1040
        %v1212 = vpop.f32.mrb[0].mxu0
        %v1213 = vadd.f32 %v1124, %v1212
        %v1214 = vpop.f32.mrb[0].mxu0
        %v1215 = vadd.f32 %v1126, %v1214
        %1216 = vmatprep.mubr.f32.mxu0 0.0
        %1217 = vmatmul.mubr.f32.gmra.mrb[0].mxu0 %v1043
        %v1218 = vpop.f32.mrb[0].mxu0
        %v1219 = vadd.f32 %v1130, %v1218
        %v1220 = vpop.f32.mrb[0].mxu0
        %v1221 = vadd.f32 %v1132, %v1220
        %1222 = vdwg.mxu0
        %v1223 = vmax.f32 %v1201, 0.0
        %v1224 = vmax.f32 %v1203, 0.0
        %v1225 = vmax.f32 %v1207, 0.0
        %v1226 = vmax.f32 %v1209, 0.0
        %v1227 = vmax.f32 %v1213, 0.0
        %v1228 = vmax.f32 %v1215, 0.0
        %v1229 = vmax.f32 %v1219, 0.0
        %v1230 = vmax.f32 %v1221, 0.0
        %v1231 = vld [vmem:[%s6] sm:$0xff]
        %v1232 = vld [vmem:[%s6 + $0x8] sm:$0xf]
        %1241 = vrot.lane.b32.xlu0 %v1223, 17
        %v1242 = vpop.permute.xlu0 %1241
        %1243 = vrot.lane.b32.xlu0 %v1224, 17
        %v1244 = vpop.permute.xlu0 %1243
        %1245 = vrot.lane.b32.xlu0 %v1225, 17
        %v1246 = vpop.permute.xlu0 %1245
        %1247 = vrot.lane.b32.xlu0 %v1226, 17
        %v1248 = vpop.permute.xlu0 %1247
        %1249 = vrot.lane.b32.xlu0 %v1227, 17
        %v1250 = vpop.permute.xlu0 %1249
        %1251 = vrot.lane.b32.xlu0 %v1228, 17
        %v1252 = vpop.permute.xlu0 %1251
        %1253 = vrot.lane.b32.xlu0 %v1229, 17
        %v1254 = vpop.permute.xlu0 %1253
        %1255 = vrot.lane.b32.xlu0 %v1230, 17
        %v1256 = vpop.permute.xlu0 %1255
        %v1257 = vsel %vm430, %v1242, %v1244
        %v1258 = vsel %vm430, %v1246, %v1248
        %v1259 = vsel %vm430, %v1250, %v1252
        %v1260 = vsel %vm430, %v1254, %v1256
        %v1269 = vsel %vm430, 0.0, %v1242
        %v1270 = vsel %vm430, 0.0, %v1246
        %v1271 = vsel %vm430, 0.0, %v1250
        %v1272 = vsel %vm430, 0.0, %v1254
        %v1273 = vsel %vm437, %v1269, 0.0
        %v1274 = vsel %vm438, %v1257, 0.0
        %v1275 = vsel %vm437, %v1270, 0.0
        %v1276 = vsel %vm438, %v1258, 0.0
        %v1277 = vsel %vm437, %v1271, 0.0
        %v1278 = vsel %vm438, %v1259, 0.0
        %v1279 = vsel %vm437, %v1272, 0.0
        %v1280 = vsel %vm438, %v1260, 0.0
        %1281 = vrot.lane.b32.xlu0 %v1223, 16
        %v1282 = vpop.permute.xlu0 %1281
        %1283 = vrot.lane.b32.xlu0 %v1224, 16
        %v1284 = vpop.permute.xlu0 %1283
        %1285 = vrot.lane.b32.xlu0 %v1225, 16
        %v1286 = vpop.permute.xlu0 %1285
        %1287 = vrot.lane.b32.xlu0 %v1226, 16
        %v1288 = vpop.permute.xlu0 %1287
        %1289 = vrot.lane.b32.xlu0 %v1227, 16
        %v1290 = vpop.permute.xlu0 %1289
        %1291 = vrot.lane.b32.xlu0 %v1228, 16
        %v1292 = vpop.permute.xlu0 %1291
        %1293 = vrot.lane.b32.xlu0 %v1229, 16
        %v1294 = vpop.permute.xlu0 %1293
        %1295 = vrot.lane.b32.xlu0 %v1230, 16
        %v1296 = vpop.permute.xlu0 %1295
        %v1297 = vsel %vm445, %v1282, %v1284
        %v1298 = vsel %vm445, %v1286, %v1288
        %v1299 = vsel %vm445, %v1290, %v1292
        %v1300 = vsel %vm445, %v1294, %v1296
        %v1309 = vsel %vm445, 0.0, %v1282
        %v1310 = vsel %vm445, 0.0, %v1286
        %v1311 = vsel %vm445, 0.0, %v1290
        %v1312 = vsel %vm445, 0.0, %v1294
        %1313 = vrot.lane.b32.xlu0 %v1223, 15
        %v1314 = vpop.permute.xlu0 %1313
        %1315 = vrot.lane.b32.xlu0 %v1224, 15
        %v1316 = vpop.permute.xlu0 %1315
        %1317 = vrot.lane.b32.xlu0 %v1225, 15
        %v1318 = vpop.permute.xlu0 %1317
        %1319 = vrot.lane.b32.xlu0 %v1226, 15
        %v1320 = vpop.permute.xlu0 %1319
        %1321 = vrot.lane.b32.xlu0 %v1227, 15
        %v1322 = vpop.permute.xlu0 %1321
        %1323 = vrot.lane.b32.xlu0 %v1228, 15
        %v1324 = vpop.permute.xlu0 %1323
        %1325 = vrot.lane.b32.xlu0 %v1229, 15
        %v1326 = vpop.permute.xlu0 %1325
        %1327 = vrot.lane.b32.xlu0 %v1230, 15
        %v1328 = vpop.permute.xlu0 %1327
        %v1329 = vsel %vm453, %v1314, %v1316
        %v1330 = vsel %vm453, %v1318, %v1320
        %v1331 = vsel %vm453, %v1322, %v1324
        %v1332 = vsel %vm453, %v1326, %v1328
        %v1341 = vsel %vm453, 0.0, %v1314
        %v1342 = vsel %vm453, 0.0, %v1318
        %v1343 = vsel %vm453, 0.0, %v1322
        %v1344 = vsel %vm453, 0.0, %v1326
        %v1345 = vsel %vm460, %v1341, 0.0
        %v1346 = vsel %vm461, %v1329, 0.0
        %v1347 = vsel %vm460, %v1342, 0.0
        %v1348 = vsel %vm461, %v1330, 0.0
        %v1349 = vsel %vm460, %v1343, 0.0
        %v1350 = vsel %vm461, %v1331, 0.0
        %v1351 = vsel %vm460, %v1344, 0.0
        %v1352 = vsel %vm461, %v1332, 0.0
        %1353 = vrot.lane.b32.xlu0 %v1223, 1
        %v1354 = vpop.permute.xlu0 %1353
        %1355 = vrot.lane.b32.xlu0 %v1224, 1
        %v1356 = vpop.permute.xlu0 %1355
        %1357 = vrot.lane.b32.xlu0 %v1225, 1
        %v1358 = vpop.permute.xlu0 %1357
        %1359 = vrot.lane.b32.xlu0 %v1226, 1
        %v1360 = vpop.permute.xlu0 %1359
        %1361 = vrot.lane.b32.xlu0 %v1227, 1
        %v1362 = vpop.permute.xlu0 %1361
        %1363 = vrot.lane.b32.xlu0 %v1228, 1
        %v1364 = vpop.permute.xlu0 %1363
        %1365 = vrot.lane.b32.xlu0 %v1229, 1
        %v1366 = vpop.permute.xlu0 %1365
        %1367 = vrot.lane.b32.xlu0 %v1230, 1
        %v1368 = vpop.permute.xlu0 %1367
        %v1369 = vsel %vm468, %v1354, %v1356
        %v1370 = vsel %vm468, %v1358, %v1360
        %v1371 = vsel %vm468, %v1362, %v1364
        %v1372 = vsel %vm468, %v1366, %v1368
        %v1381 = vsel %vm468, 0.0, %v1354
        %v1382 = vsel %vm468, 0.0, %v1358
        %v1383 = vsel %vm468, 0.0, %v1362
        %v1384 = vsel %vm468, 0.0, %v1366
        %v1385 = vsel %vm437, %v1381, 0.0
        %v1386 = vsel %vm438, %v1369, 0.0
        %v1387 = vsel %vm437, %v1382, 0.0
        %v1388 = vsel %vm438, %v1370, 0.0
        %v1389 = vsel %vm437, %v1383, 0.0
        %v1390 = vsel %vm438, %v1371, 0.0
        %v1391 = vsel %vm437, %v1384, 0.0
        %v1392 = vsel %vm438, %v1372, 0.0
        %1393 = vrot.lane.b32.xlu0 %v1223, 127
        %v1394 = vpop.permute.xlu0 %1393
        %1395 = vrot.lane.b32.xlu0 %v1224, 127
        %v1396 = vpop.permute.xlu0 %1395
        %1397 = vrot.lane.b32.xlu0 %v1225, 127
        %v1398 = vpop.permute.xlu0 %1397
        %1399 = vrot.lane.b32.xlu0 %v1226, 127
        %v1400 = vpop.permute.xlu0 %1399
        %1401 = vrot.lane.b32.xlu0 %v1227, 127
        %v1402 = vpop.permute.xlu0 %1401
        %1403 = vrot.lane.b32.xlu0 %v1228, 127
        %v1404 = vpop.permute.xlu0 %1403
        %1405 = vrot.lane.b32.xlu0 %v1229, 127
        %v1406 = vpop.permute.xlu0 %1405
        %1407 = vrot.lane.b32.xlu0 %v1230, 127
        %v1408 = vpop.permute.xlu0 %1407
        %v1409 = vsel %vm479, %v1394, %v1396
        %v1410 = vsel %vm479, %v1398, %v1400
        %v1411 = vsel %vm479, %v1402, %v1404
        %v1412 = vsel %vm479, %v1406, %v1408
        %v1421 = vsel %vm479, %v1396, 0.0
        %v1422 = vsel %vm479, %v1400, 0.0
        %v1423 = vsel %vm479, %v1404, 0.0
        %v1424 = vsel %vm479, %v1408, 0.0
        %v1425 = vsel %vm460, %v1409, 0.0
        %v1426 = vsel %vm461, %v1421, 0.0
        %v1427 = vsel %vm460, %v1410, 0.0
        %v1428 = vsel %vm461, %v1422, 0.0
        %v1429 = vsel %vm460, %v1411, 0.0
        %v1430 = vsel %vm461, %v1423, 0.0
        %v1431 = vsel %vm460, %v1412, 0.0
        %v1432 = vsel %vm461, %v1424, 0.0
        %1433 = vrot.lane.b32.xlu0 %v1223, 113
        %v1434 = vpop.permute.xlu0 %1433
        %1435 = vrot.lane.b32.xlu0 %v1224, 113
        %v1436 = vpop.permute.xlu0 %1435
        %1437 = vrot.lane.b32.xlu0 %v1225, 113
        %v1438 = vpop.permute.xlu0 %1437
        %1439 = vrot.lane.b32.xlu0 %v1226, 113
        %v1440 = vpop.permute.xlu0 %1439
        %1441 = vrot.lane.b32.xlu0 %v1227, 113
        %v1442 = vpop.permute.xlu0 %1441
        %1443 = vrot.lane.b32.xlu0 %v1228, 113
        %v1444 = vpop.permute.xlu0 %1443
        %1445 = vrot.lane.b32.xlu0 %v1229, 113
        %v1446 = vpop.permute.xlu0 %1445
        %1447 = vrot.lane.b32.xlu0 %v1230, 113
        %v1448 = vpop.permute.xlu0 %1447
        %v1449 = vsel %vm490, %v1434, %v1436
        %v1450 = vsel %vm490, %v1438, %v1440
        %v1451 = vsel %vm490, %v1442, %v1444
        %v1452 = vsel %vm490, %v1446, %v1448
        %v1461 = vsel %vm490, %v1436, 0.0
        %v1462 = vsel %vm490, %v1440, 0.0
        %v1463 = vsel %vm490, %v1444, 0.0
        %v1464 = vsel %vm490, %v1448, 0.0
        %v1465 = vsel %vm437, %v1449, 0.0
        %v1466 = vsel %vm438, %v1461, 0.0
        %v1467 = vsel %vm437, %v1450, 0.0
        %v1468 = vsel %vm438, %v1462, 0.0
        %v1469 = vsel %vm437, %v1451, 0.0
        %v1470 = vsel %vm438, %v1463, 0.0
        %v1471 = vsel %vm437, %v1452, 0.0
        %v1472 = vsel %vm438, %v1464, 0.0
        %1473 = vrot.lane.b32.xlu0 %v1223, 112
        %v1474 = vpop.permute.xlu0 %1473
        %1475 = vrot.lane.b32.xlu0 %v1224, 112
        %v1476 = vpop.permute.xlu0 %1475
        %1477 = vrot.lane.b32.xlu0 %v1225, 112
        %v1478 = vpop.permute.xlu0 %1477
        %1479 = vrot.lane.b32.xlu0 %v1226, 112
        %v1480 = vpop.permute.xlu0 %1479
        %1481 = vrot.lane.b32.xlu0 %v1227, 112
        %v1482 = vpop.permute.xlu0 %1481
        %1483 = vrot.lane.b32.xlu0 %v1228, 112
        %v1484 = vpop.permute.xlu0 %1483
        %1485 = vrot.lane.b32.xlu0 %v1229, 112
        %v1486 = vpop.permute.xlu0 %1485
        %1487 = vrot.lane.b32.xlu0 %v1230, 112
        %v1488 = vpop.permute.xlu0 %1487
        %v1489 = vsel %vm501, %v1474, %v1476
        %v1490 = vsel %vm501, %v1478, %v1480
        %v1491 = vsel %vm501, %v1482, %v1484
        %v1492 = vsel %vm501, %v1486, %v1488
        %v1501 = vsel %vm501, %v1476, 0.0
        %v1502 = vsel %vm501, %v1480, 0.0
        %v1503 = vsel %vm501, %v1484, 0.0
        %v1504 = vsel %vm501, %v1488, 0.0
        %1505 = vrot.lane.b32.xlu0 %v1223, 111
        %v1506 = vpop.permute.xlu0 %1505
        %1507 = vrot.lane.b32.xlu0 %v1224, 111
        %v1508 = vpop.permute.xlu0 %1507
        %1509 = vrot.lane.b32.xlu0 %v1225, 111
        %v1510 = vpop.permute.xlu0 %1509
        %1511 = vrot.lane.b32.xlu0 %v1226, 111
        %v1512 = vpop.permute.xlu0 %1511
        %1513 = vrot.lane.b32.xlu0 %v1227, 111
        %v1514 = vpop.permute.xlu0 %1513
        %1515 = vrot.lane.b32.xlu0 %v1228, 111
        %v1516 = vpop.permute.xlu0 %1515
        %1517 = vrot.lane.b32.xlu0 %v1229, 111
        %v1518 = vpop.permute.xlu0 %1517
        %1519 = vrot.lane.b32.xlu0 %v1230, 111
        %v1520 = vpop.permute.xlu0 %1519
        %v1521 = vsel %vm509, %v1506, %v1508
        %v1522 = vsel %vm509, %v1510, %v1512
        %v1523 = vsel %vm509, %v1514, %v1516
        %v1524 = vsel %vm509, %v1518, %v1520
        %v1533 = vsel %vm509, %v1508, 0.0
        %v1534 = vsel %vm509, %v1512, 0.0
        %v1535 = vsel %vm509, %v1516, 0.0
        %v1536 = vsel %vm509, %v1520, 0.0
        %v1537 = vsel %vm460, %v1521, 0.0
        %v1538 = vsel %vm461, %v1533, 0.0
        %v1539 = vsel %vm460, %v1522, 0.0
        %v1540 = vsel %vm461, %v1534, 0.0
        %v1541 = vsel %vm460, %v1523, 0.0
        %v1542 = vsel %vm461, %v1535, 0.0
        %v1543 = vsel %vm460, %v1524, 0.0
        %v1544 = vsel %vm461, %v1536, 0.0
        %v1547 = vcombine.high %v1231, %v1231
        %v1549 = vsel %vm1032, %v1232, 0
        %1551 = vmatprep.subr.mxu0 %v1274
        %1552 = vmatpush1.msra.mxu0 %v1273
        %1553 = vmatprep.subr.mxu0 %v1276
        %1554 = vmatpush1.msra.mxu0 %v1275
        %1555 = vmatprep.subr.mxu0 %v1278
        %1556 = vmatpush1.msra.mxu0 %v1277
        %1557 = vmatprep.subr.mxu0 %v1280
        %1558 = vmatpush1.msra.mxu0 %v1279
        %1559 = vmatprep.subr.mxu0 %v1297
        %1560 = vmatpush1.msra.mxu0 %v1309
        %1561 = vmatprep.subr.mxu0 %v1298
        %1562 = vmatpush1.msra.mxu0 %v1310
        %1563 = vmatprep.subr.mxu0 %v1299
        %1564 = vmatpush1.msra.mxu0 %v1311
        %1565 = vmatprep.subr.mxu0 %v1300
        %1566 = vmatpush1.msra.mxu0 %v1312
        %1567 = vmatprep.subr.mxu0 %v1346
        %1568 = vmatpush1.msra.mxu0 %v1345
        %1569 = vmatprep.subr.mxu0 %v1348
        %1570 = vmatpush1.msra.mxu0 %v1347
        %1571 = vmatprep.subr.mxu0 %v1350
        %1572 = vmatpush1.msra.mxu0 %v1349
        %1573 = vmatprep.subr.mxu0 %v1352
        %1574 = vmatpush1.msra.mxu0 %v1351
        %1575 = vmatprep.subr.mxu0 %v1386
        %1576 = vmatpush1.msra.mxu0 %v1385
        %1577 = vmatprep.subr.mxu0 %v1388
        %1578 = vmatpush1.msra.mxu0 %v1387
        %1579 = vmatprep.subr.mxu0 %v1390
        %1580 = vmatpush1.msra.mxu0 %v1389
        %1581 = vmatprep.subr.mxu0 %v1392
        %1582 = vmatpush1.msra.mxu0 %v1391
        %1583 = vmatprep.subr.mxu0 %v1224
        %1584 = vmatpush1.msra.mxu0 %v1223
        %1585 = vmatprep.subr.mxu0 %v1226
        %1586 = vmatpush1.msra.mxu0 %v1225
        %1587 = vmatprep.subr.mxu0 %v1228
        %1588 = vmatpush1.msra.mxu0 %v1227
        %1589 = vmatprep.subr.mxu0 %v1230
        %1590 = vmatpush1.msra.mxu0 %v1229
        %1591 = vmatprep.subr.mxu0 %v1426
        %1592 = vmatpush1.msra.mxu0 %v1425
        %1593 = vmatprep.subr.mxu0 %v1428
        %1594 = vmatpush1.msra.mxu0 %v1427
        %1595 = vmatprep.subr.mxu0 %v1430
        %1596 = vmatpush1.msra.mxu0 %v1429
        %1597 = vmatprep.subr.mxu0 %v1432
        %1598 = vmatpush1.msra.mxu0 %v1431
        %1599 = vmatprep.subr.mxu0 %v1466
        %1600 = vmatpush1.msra.mxu0 %v1465
        %1601 = vmatprep.subr.mxu0 %v1468
        %1602 = vmatpush1.msra.mxu0 %v1467
        %1603 = vmatprep.subr.mxu0 %v1470
        %1604 = vmatpush1.msra.mxu0 %v1469
        %1605 = vmatprep.subr.mxu0 %v1472
        %1606 = vmatpush1.msra.mxu0 %v1471
        %1607 = vmatprep.subr.mxu0 %v1501
        %1608 = vmatpush1.msra.mxu0 %v1489
        %1609 = vmatprep.subr.mxu0 %v1502
        %1610 = vmatpush1.msra.mxu0 %v1490
        %1611 = vmatprep.subr.mxu0 %v1503
        %1612 = vmatpush1.msra.mxu0 %v1491
        %1613 = vmatprep.subr.mxu0 %v1504
        %1614 = vmatpush1.msra.mxu0 %v1492
        %1615 = vmatprep.mubr.f32.mxu0 %v1547
        %1616 = vmatmul.mubr.f32.gmra.mrb[0].mxu0 %v1231
        %v1617 = vpop.f32.mrb[0].mxu0
        %v1618 = vadd.f32 0.0, %v1617
        %v1619 = vpop.f32.mrb[0].mxu0
        %v1620 = vadd.f32 0.0, %v1619
        %1621 = vdwg.mxu0
        %1622 = vmatprep.subr.mxu0 %v1538
        %1623 = vmatpush1.msra.mxu0 %v1537
        %1624 = vmatprep.subr.mxu0 %v1540
        %1625 = vmatpush1.msra.mxu0 %v1539
        %1626 = vmatprep.subr.mxu0 %v1542
        %1627 = vmatpush1.msra.mxu0 %v1541
        %1628 = vmatprep.subr.mxu0 %v1544
        %1629 = vmatpush1.msra.mxu0 %v1543
        %1630 = vmatprep.subr.mxu0 0.0
        %1631 = vmatpush1.msra.mxu0 0.0
        %1632 = vmatprep.subr.mxu0 0.0
        %1633 = vmatpush1.msra.mxu0 0.0
        %1634 = vmatprep.subr.mxu0 0.0
        %1635 = vmatpush1.msra.mxu0 0.0
        %1636 = vmatprep.subr.mxu0 0.0
        %1637 = vmatpush1.msra.mxu0 0.0
        %1638 = vmatprep.subr.mxu0 0.0
        %1639 = vmatpush1.msra.mxu0 0.0
        %1640 = vmatprep.subr.mxu0 0.0
        %1641 = vmatpush1.msra.mxu0 0.0
        %1642 = vmatprep.subr.mxu0 0.0
        %1643 = vmatpush1.msra.mxu0 0.0
        %1644 = vmatprep.subr.mxu0 0.0
        %1645 = vmatpush1.msra.mxu0 0.0
        %1646 = vmatprep.subr.mxu0 0.0
        %1647 = vmatpush1.msra.mxu0 0.0
        %1648 = vmatprep.subr.mxu0 0.0
        %1649 = vmatpush1.msra.mxu0 0.0
        %1650 = vmatprep.subr.mxu0 0.0
        %1651 = vmatpush1.msra.mxu0 0.0
        %1652 = vmatprep.subr.mxu0 0.0
        %1653 = vmatpush1.msra.mxu0 0.0
        %1654 = vmatprep.subr.mxu0 0.0
        %1655 = vmatpush1.msra.mxu0 0.0
        %1656 = vmatprep.subr.mxu0 0.0
        %1657 = vmatpush1.msra.mxu0 0.0
        %1658 = vmatprep.subr.mxu0 0.0
        %1659 = vmatpush1.msra.mxu0 0.0
        %1660 = vmatprep.subr.mxu0 0.0
        %1661 = vmatpush1.msra.mxu0 0.0
        %1662 = vmatprep.subr.mxu0 0.0
        %1663 = vmatpush1.msra.mxu0 0.0
        %1664 = vmatprep.subr.mxu0 0.0
        %1665 = vmatpush1.msra.mxu0 0.0
        %1666 = vmatprep.subr.mxu0 0.0
        %1667 = vmatpush1.msra.mxu0 0.0
        %1668 = vmatprep.subr.mxu0 0.0
        %1669 = vmatpush1.msra.mxu0 0.0
        %1670 = vmatprep.subr.mxu0 0.0
        %1671 = vmatpush1.msra.mxu0 0.0
        %1672 = vmatprep.subr.mxu0 0.0
        %1673 = vmatpush1.msra.mxu0 0.0
        %1674 = vmatprep.subr.mxu0 0.0
        %1675 = vmatpush1.msra.mxu0 0.0
        %1676 = vmatprep.subr.mxu0 0.0
        %1677 = vmatpush1.msra.mxu0 0.0
        %1678 = vmatprep.subr.mxu0 0.0
        %1679 = vmatpush1.msra.mxu0 0.0
        %1680 = vmatprep.subr.mxu0 0.0
        %1681 = vmatpush1.msra.mxu0 0.0
        %1682 = vmatprep.subr.mxu0 0.0
        %1683 = vmatpush1.msra.mxu0 0.0
        %1684 = vmatprep.subr.mxu0 0.0
        %1685 = vmatpush1.msra.mxu0 0.0
        %1686 = vmatprep.mubr.f32.mxu0 0.0
        %1687 = vmatmul.mubr.f32.gmra.mrb[0].mxu0 %v1549
        %v1688 = vpop.f32.mrb[0].mxu0
        %v1689 = vadd.f32 %v1618, %v1688
        %v1690 = vpop.f32.mrb[0].mxu0
        %v1691 = vadd.f32 %v1620, %v1690
        %1692 = vdwg.mxu0
        %v1693 = vxor.u32 %v1689, 2147483648
        %v1694 = vxor.u32 %v1691, 2147483648
        %v1695 = vmul.f32 %v1693, 1.442695
        %v1696 = vpow.pop %v1695
        %v1697 = vmul.f32 %v1694, 1.442695
        %v1698 = vpow.pop %v1697
        %v1699 = vadd.f32 %v1696, 1.0
        %v1700 = vadd.f32 %v1698, 1.0
        %v1701 = vrcp.pop %v1699
        %v1702 = vmul.f32 1.0, %v1701
        %v1703 = vrcp.pop %v1700
        %v1704 = vmul.f32 1.0, %v1703
        %v1705 = vadd.f32 %v1702, 1e-08
        %v1706 = vadd.f32 %v1704, 1e-08
        %v1707 = vlog2.pop %v1705
        %v1708 = vmul.f32 %v1707, 0.6931472
        %v1709 = vlog2.pop %v1706
        %v1710 = vmul.f32 %v1709, 0.6931472
        %v1711 = vsub.f32 1.0, %v1702
        %v1712 = vsub.f32 1.0, %v1704
        %v1713 = vadd.f32 %v1711, 1e-08
        %v1714 = vadd.f32 %v1712, 1e-08
        %v1715 = vlog2.pop %v1713
        %v1716 = vmul.f32 %v1715, 0.6931472
        %v1717 = vlog2.pop %v1714
        %v1718 = vmul.f32 %v1717, 0.6931472
        %v1719 = vsub.f32 %v1708, %v1716
        %v1720 = vsub.f32 %v1710, %v1718
        %v1721 = vld [vmem:[%s383] sm:$0xff]
        %v1723 = vcombine.high %v1721, %v1721
        %v1725 = vadd.f32 %v1719, %v1721
        %v1726 = vadd.f32 %v1720, %v1723
        %v1727 = vrcp.pop 0.10000001
        %v1728 = vmul.f32 %v1725, %v1727
        %v1729 = vmul.f32 %v1726, %v1727
        %v1730 = vxor.u32 %v1728, 2147483648
        %v1731 = vxor.u32 %v1729, 2147483648
        %v1732 = vmul.f32 %v1730, 1.442695
        %v1733 = vpow.pop %v1732
        %v1734 = vmul.f32 %v1731, 1.442695
        %v1735 = vpow.pop %v1734
        %v1736 = vadd.f32 %v1733, 1.0
        %v1737 = vadd.f32 %v1735, 1.0
        %v1738 = vrcp.pop %v1736
        %v1739 = vmul.f32 1.0, %v1738
        %v1740 = vrcp.pop %v1737
        %v1741 = vmul.f32 1.0, %v1740
        %v1744 = vcombine.low %v1739, %v1741
        %v1746 = vmul.f32 %v415, %v1744
        %1747 = vst [vmem:[%s373] sm:$0xff] %v1744
        %1748 = vst [vmem:[%s359] sm:$0xff] %v1746
        %v1749 = vsub.f32 %v415, %v1746
        %1750 = vst [vmem:[%s366] sm:$0xff] %v1749
        %s1751 = sand.u32 %s193, 1
        %s1752 = scalar_lea.sflag [#allocation4], %s1751
        %s1753 = sand.u32 %s193, 1
        %s1754 = smul.addr %s1753, 8
        %s1755 = scalar_lea.vmem [#allocation5], %s1754
        %s1756 = sand.u32 %s28, 1
        %s1757 = scalar_lea.sflag [#allocation7], %s1756
        %s1758 = sand.u32 %s219, 1
        %s1759 = smul.addr %s1758, 8
        %s1760 = scalar_lea.vmem [#allocation6], %s1759
        %s1761 = sand.u32 %s28, 1
        %s1762 = scalar_lea.sflag [#allocation7], %s1761
        %s1763 = sand.u32 %s245, 1
        %s1764 = smul.addr %s1763, 8
        %s1765 = scalar_lea.vmem [#allocation8], %s1764
        // Predicated region
        $region53: #{tpu_custom_call.1} parent=47 // pred_check
          %p1766 = pneg %p203
        $region54: #{tpu_custom_call.1} parent=47 // pred_check_branch
          %1768 = sbr.rel (%p1766) target = $region56
        $region55: #{tpu_custom_call.1} parent=47 // pred_region
          %s1770 = ssub.s32 128, 128
          %1771 = vsyncadd %s1752, %s1770
          %s1772 = smul.addr %s28, 2
          %s1773 = smul.addr %s1772, 64
          %s1774 = scalar_lea.hbm %s7, %s1773
          %s1776 = sshll.u32 %s1755, 4
          %s1777 = int_to_ptr.vmem [resolvable:$true] %s1776
          %1779 = dma.vmem_to_hbm [thread:$0]  %s1777, 128, %s1774, %s1752
        $region56: #{tpu_custom_call.1} parent=47 // pred_fallthru
          _
        // Predicated region
        $region57: #{tpu_custom_call.1} parent=47 // pred_check
          %p1780 = pneg %p229
        $region58: #{tpu_custom_call.1} parent=47 // pred_check_branch
          %1782 = sbr.rel (%p1780) target = $region60
        $region59: #{tpu_custom_call.1} parent=47 // pred_region
          %s1784 = ssub.s32 128, 128
          %1785 = vsyncadd %s1757, %s1784
          %s1786 = smul.addr %s28, 2
          %s1787 = smul.addr %s1786, 64
          %s1788 = scalar_lea.hbm %s8, %s1787
          %s1790 = sshll.u32 %s1760, 4
          %s1791 = int_to_ptr.vmem [resolvable:$true] %s1790
          %1793 = dma.vmem_to_hbm [thread:$0]  %s1791, 128, %s1788, %s1757
        $region60: #{tpu_custom_call.1} parent=47 // pred_fallthru
          _
        // Predicated region
        $region61: #{tpu_custom_call.1} parent=47 // pred_check
          %p1794 = pneg %p255
        $region62: #{tpu_custom_call.1} parent=47 // pred_check_branch
          %1796 = sbr.rel (%p1794) target = $region64
        $region63: #{tpu_custom_call.1} parent=47 // pred_region
          %s1798 = ssub.s32 128, 128
          %1799 = vsyncadd %s1762, %s1798
          %s1800 = smul.addr %s28, 2
          %s1801 = smul.addr %s1800, 64
          %s1802 = scalar_lea.hbm %s9, %s1801
          %s1804 = sshll.u32 %s1765, 4
          %s1805 = int_to_ptr.vmem [resolvable:$true] %s1804
          %1807 = dma.vmem_to_hbm [thread:$0]  %s1805, 128, %s1802, %s1762
        $region64: #{tpu_custom_call.1} parent=47 // pred_fallthru
          _
      $region48: #{tpu_custom_call.1} parent=5 // pred_fallthru
        _
      %p1808 = scmp.le.s32.totalorder 2, %s23
      // Predicated region
      $region65: #{tpu_custom_call.1} parent=5 // pred_check
        %p1809 = pneg %p1808
      $region66: #{tpu_custom_call.1} parent=5 // pred_check_branch
        %1811 = sbr.rel (%p1809) target = $region68
      $region67: #{tpu_custom_call.1} parent=5 // pred_region
        %s1812 = ssub.s32 %s23, 2
        // Predicated region
        $region69: #{tpu_custom_call.1} parent=67 // pred_check
          %p1813 = pneg %p209
        $region70: #{tpu_custom_call.1} parent=67 // pred_check_branch
          %1815 = sbr.rel (%p1813) target = $region72
        $region71: #{tpu_custom_call.1} parent=67 // pred_region
          %s1816 = sand.u32 %s194, 1
          %s1817 = scalar_lea.sflag [#allocation4], %s1816
          %s1818 = sand.u32 %s194, 1
          %s1819 = smul.addr %s1818, 8
          %s1820 = scalar_lea.vmem [#allocation5], %s1819
          %1821 = dma.done %s1817, 128
        $region72: #{tpu_custom_call.1} parent=67 // pred_fallthru
          _
        // Predicated region
        $region73: #{tpu_custom_call.1} parent=67 // pred_check
          %p1822 = pneg %p235
        $region74: #{tpu_custom_call.1} parent=67 // pred_check_branch
          %1824 = sbr.rel (%p1822) target = $region76
        $region75: #{tpu_custom_call.1} parent=67 // pred_region
          %s1825 = sand.u32 %s29, 1
          %s1826 = scalar_lea.sflag [#allocation7], %s1825
          %s1827 = sand.u32 %s220, 1
          %s1828 = smul.addr %s1827, 8
          %s1829 = scalar_lea.vmem [#allocation6], %s1828
          %1830 = dma.done %s1826, 128
        $region76: #{tpu_custom_call.1} parent=67 // pred_fallthru
          _
        // Predicated region
        $region77: #{tpu_custom_call.1} parent=67 // pred_check
          %p1831 = pneg %p261
        $region78: #{tpu_custom_call.1} parent=67 // pred_check_branch
          %1833 = sbr.rel (%p1831) target = $region80
        $region79: #{tpu_custom_call.1} parent=67 // pred_region
          %s1834 = sand.u32 %s29, 1
          %s1835 = scalar_lea.sflag [#allocation7], %s1834
          %s1836 = sand.u32 %s246, 1
          %s1837 = smul.addr %s1836, 8
          %s1838 = scalar_lea.vmem [#allocation8], %s1837
          %1839 = dma.done %s1835, 128
        $region80: #{tpu_custom_call.1} parent=67 // pred_fallthru
          _
      $region68: #{tpu_custom_call.1} parent=5 // pred_fallthru
        _
    $region6: #{tpu_custom_call.1} parent=1 // loop_footer
      %s27 = sadd.s32 1, %s23
    $region7: #{tpu_custom_call.1} parent=1 // loop_footer_branch
      %22 = sbr.rel target = $region3
    $region8: #{tpu_custom_call.1} parent=1 // loop_exit
      _
    %1840 = vsyncpa [#allocation3], 1
    %s1841 = scalar_lea.sflag [#allocation3], 1
    %1842 = vsyncpa %s1841, 1
    %1843 = vsyncpa [#allocation4], 1
    %s1844 = scalar_lea.sflag [#allocation4], 1
    %1845 = vsyncpa %s1844, 1
    %1846 = vsyncpa [#allocation7], 1
    %s1847 = scalar_lea.sflag [#allocation7], 1
    %1848 = vsyncpa %s1847, 1

</llo_original>
